<compile_context>
chip_gen: v7x
topology: tpu7x:2x2x1
jax: 0.10.0
libtpu: 0.0.40
codegen_flags: <defaults>
</compile_context>

<pallas_src>
import functools

import jax
import jax.numpy as jnp
from jax.experimental import pallas as pl
from jax.experimental.pallas import tpu as pltpu


# ----------------------------------------------------------------------------
# Fused kernel: bidirectional 2-layer LSTM + fc1/ReLU/fc2/sigmoid head.
# x is the embedded sequence, time-major flattened (row = t*B + b).
# ----------------------------------------------------------------------------
def sentiment_lstm_kernel(x_ref, l0_wih_ref, l0_whh_ref, l0_b_ref,
                          l1_wih_ref, l1_whhf_ref, l1_b_ref,
                          w1_ref, b1_ref, w2_ref, b2_ref,
                          o_ref, *, T, B, H):
    f32 = jnp.float32
    cdt = l0_wih_ref.dtype                 # bf16 compute dtype for MXU inputs
    G = 4 * H

    # ---------------- layer 0: bidirectional LSTM over the embedded tokens ----------
    # Hoisted input projection for BOTH directions in one (T*B, E) @ (E, 8H) matmul.
    x = x_ref[...]                                                    # (T*B, E) bf16
    gx = jnp.dot(x, l0_wih_ref[...], preferred_element_type=f32) + l0_b_ref[...]
    gxf = gx[:, :G]                                                   # (T*B, 4H) f32
    gxb = gx[:, G:]

    whh_f = l0_whh_ref[0]                                             # (H, 4H) bf16
    whh_b = l0_whh_ref[1]

    # Both directions interleaved in one statically-unrolled loop, states stacked
    # along sublanes: [fwd ; bwd] -> (2B, H).  All time indices are static.
    h_st = jnp.zeros((2 * B, H), f32)
    c_st = jnp.zeros((2 * B, H), f32)
    hs_f = [None] * T                       # layer-0 fwd hidden at each original time
    hs_b = [None] * T                       # layer-0 bwd hidden at each original time
    # TODO(synk): for production T, replace the full unroll with
    #             lax.fori_loop(..., unroll=4..8) writing into a VMEM scratch.
    for s in range(T):
        tf = s                              # forward walks 0 .. T-1
        tb = T - 1 - s                      # backward walks T-1 .. 0
        gates_f = gxf[tf * B:(tf + 1) * B] + jnp.dot(
            h_st[:B].astype(cdt), whh_f, preferred_element_type=f32)
        gates_b = gxb[tb * B:(tb + 1) * B] + jnp.dot(
            h_st[B:].astype(cdt), whh_b, preferred_element_type=f32)
        gates = jnp.concatenate([gates_f, gates_b], axis=0)          # (2B, 4H)
        ifo = jax.nn.sigmoid(gates[:, :3 * H])                       # [i | f | o], one pass
        g = jnp.tanh(gates[:, 3 * H:])
        c_st = ifo[:, H:2 * H] * c_st + ifo[:, :H] * g
        h_st = ifo[:, 2 * H:] * jnp.tanh(c_st)
        hs_f[tf] = h_st[:B]
        hs_b[tb] = h_st[B:]

    # Layer-0 features in original time order, time-major rows (t*B + b); kept as
    # in-kernel values -> no HBM round trip between the two LSTM layers.
    x1 = jnp.concatenate(
        [jnp.concatenate([hs_f[t], hs_b[t]], axis=-1) for t in range(T)],
        axis=0)                                                       # (T*B, 2H) f32

    # ---------------- layer 1 (bidirectional): only lstm_out[:, -1, :] is needed -----
    # Forward direction: hoisted projection + full recurrence, keep only the final h.
    w1f = l1_wih_ref[0]                                               # (2H, 4H) bf16
    gx1 = jnp.dot(x1.astype(cdt), w1f, preferred_element_type=f32) + l1_b_ref[0]
    whh1 = l1_whhf_ref[...]                                           # (H, 4H) bf16

    h = jnp.zeros((B, H), f32)
    c = jnp.zeros((B, H), f32)
    for t in range(T):
        gates = gx1[t * B:(t + 1) * B] + jnp.dot(
            h.astype(cdt), whh1, preferred_element_type=f32)
        ifo = jax.nn.sigmoid(gates[:, :3 * H])
        g = jnp.tanh(gates[:, 3 * H:])
        c = ifo[:, H:2 * H] * c + ifo[:, :H] * g
        h = ifo[:, 2 * H:] * jnp.tanh(c)
    h1_fwd = h

    # Backward direction: its output at original time T-1 is its FIRST step with
    # h0 = c0 = 0, so the recurrent (h @ W_hh) term vanishes (layer-1 backward W_hh is
    # mathematically unused and is not even passed to this kernel).
    w1b = l1_wih_ref[1]
    gates_b1 = jnp.dot(x1[(T - 1) * B:].astype(cdt), w1b,
                       preferred_element_type=f32) + l1_b_ref[1]
    ifo_b = jax.nn.sigmoid(gates_b1[:, :3 * H])
    g_b = jnp.tanh(gates_b1[:, 3 * H:])
    h1_bwd = ifo_b[:, 2 * H:] * jnp.tanh(ifo_b[:, :H] * g_b)

    # ---------------- head: fc1 + ReLU (+ dropout identity) + fc2 + sigmoid ----------
    # TODO(synk): F.dropout(p=0.3) / LSTM inter-layer dropout are train-time stochastic;
    #             treated as identity (eval semantics).
    h_cat = jnp.concatenate([h1_fwd, h1_bwd], axis=-1)                # (B, 2H)
    hid = jnp.dot(h_cat.astype(cdt), w1_ref[...],
                  preferred_element_type=f32) + b1_ref[...]           # (B, 128)
    hid = jnp.maximum(hid, 0.0)
    # fc2 output width 1 -> VPU multiply + lane reduction instead of an N=1 MXU matmul.
    y = jnp.sum(hid * w2_ref[...].astype(f32), axis=-1, keepdims=True) + b2_ref[...]
    o_ref[...] = jax.nn.sigmoid(y)


def run_sentiment_lstm(x, l0_w_ih, l0_w_hh, l0_b, l1_w_ih, l1_w_hh_f, l1_b,
                       fc1_w, fc1_b, fc2_w, fc2_b, *, T, B, H):
    args = (x, l0_w_ih, l0_w_hh, l0_b, l1_w_ih, l1_w_hh_f, l1_b,
            fc1_w, fc1_b, fc2_w, fc2_b)
    vmem_specs = [pl.BlockSpec(memory_space=pltpu.MemorySpace.VMEM) for _ in args]
    return pl.pallas_call(
        functools.partial(sentiment_lstm_kernel, T=T, B=B, H=H),
        out_shape=jax.ShapeDtypeStruct((B, 1), jnp.float32),
        in_specs=vmem_specs,
        out_specs=pl.BlockSpec(memory_space=pltpu.MemorySpace.VMEM),
        # Explicit scoped-VMEM budget; at production T/H the projections/features must be
        # time-chunked to fit (most acutely on v7x's 64 MiB physical VMEM).
        compiler_params=pltpu.CompilerParams(vmem_limit_bytes=32 * 1024 * 1024),
    )(*args)


# ----------------------------------------------------------------------------
# Full model forward.
# ----------------------------------------------------------------------------
@jax.jit
def sentiment_lstm_forward(tokens, params):
    """tokens: (B, T) int32 ids. Returns (B, 1) sigmoid scores."""
    B, T = tokens.shape
    H = params["l0_w_hh"].shape[1]

    # Time-major flattened gather (row = t*B + b): avoids transposing the embedded
    # sequence — only the tiny (B, T) id matrix is transposed.
    # TODO(synk): at production sizes, fuse this gather into the kernel via
    #             PrefetchScalarGridSpec scalar-prefetched ids + a row-gather BlockSpec
    #             to remove the (T*B, E) HBM write + re-read.
    ids = tokens.T.reshape(-1)
    x = jnp.take(params["embedding"], ids, axis=0)                    # (T*B, E) bf16

    return run_sentiment_lstm(
        x,
        params["l0_w_ih"], params["l0_w_hh"], params["l0_b"],
        params["l1_w_ih"], params["l1_w_hh"][0], params["l1_b"],
        params["fc1_w"], params["fc1_b"], params["fc2_w"], params["fc2_b"],
        T=T, B=B, H=H)


# ----------------------------------------------------------------------------
# Deterministic parameter construction.
# ----------------------------------------------------------------------------
def make_params(key, vocab_size, embedding_dim, hidden_dim):
    keys = iter(jax.random.split(key, 32))
    scale = 0.1
    wdt = jnp.bfloat16   # weight storage dtype (bf16 MXU path); gate/state math stays f32

    def rnd(shape, dtype=jnp.float32):
        return (scale * jax.random.normal(next(keys), shape, jnp.float32)).astype(dtype)

    E, H = embedding_dim, hidden_dim
    return {
        "embedding": rnd((vocab_size, E), wdt),
        # LSTM weights stored (in_dim, 4H) with gate columns ordered [i, f, o, g]
        # (pure column permutation of PyTorch's (i, f, g, o); a real checkpoint would be
        # transposed + column-permuted at load time).
        # Layer 0: both directions' W_ih concatenated on the output axis -> one matmul.
        "l0_w_ih": rnd((E, 8 * H), wdt),             # [:, :4H] fwd, [:, 4H:] bwd
        "l0_w_hh": rnd((2, H, 4 * H), wdt),          # [0] fwd, [1] bwd
        "l0_b": rnd((1, 8 * H)) + rnd((1, 8 * H)),   # b_ih + b_hh, f32
        "l1_w_ih": rnd((2, 2 * H, 4 * H), wdt),
        # NOTE: l1_w_hh[1] (layer-1 backward recurrent weights) cannot influence
        # lstm_out[:, -1, :] (backward last-time output = its first step, h0=c0=0);
        # only [0] is passed to the kernel.
        "l1_w_hh": rnd((2, H, 4 * H), wdt),
        "l1_b": rnd((2, 1, 4 * H)) + rnd((2, 1, 4 * H)),
        # Head: fc1 stored (in, out); fc2 kept as a (1, 128) row vector (reduce path).
        "fc1_w": rnd((2 * H, 128), wdt),
        "fc1_b": rnd((1, 128)),
        "fc2_w": rnd((1, 128), wdt),
        "fc2_b": rnd((1, 1)),
    }


if __name__ == "__main__":
    # Small, module-consistent shapes.
    B, T = 2, 8
    VOCAB, EMB, HID = 50, 16, 32

    key = jax.random.PRNGKey(0)
    k_tok, k_par = jax.random.split(key)

    tokens = jax.random.randint(k_tok, (B, T), 0, VOCAB, dtype=jnp.int32)
    params = make_params(k_par, VOCAB, EMB, HID)

    out = sentiment_lstm_forward(tokens, params)
    jax.block_until_ready(out)
    assert out.shape == (B, 1)
    print("KERNEL_OK")
</pallas_src>

<mosaic_0001>
module attributes {stable_mosaic.version = 11 : i64} {
  func.func @sentiment_lstm_kernel(%arg0: memref<16x16xbf16, #tpu.memory_space<vmem>>, %arg1: memref<16x256xbf16, #tpu.memory_space<vmem>>, %arg2: memref<2x32x128xbf16, #tpu.memory_space<vmem>>, %arg3: memref<1x256xf32, #tpu.memory_space<vmem>>, %arg4: memref<2x64x128xbf16, #tpu.memory_space<vmem>>, %arg5: memref<32x128xbf16, #tpu.memory_space<vmem>>, %arg6: memref<2x1x128xf32, #tpu.memory_space<vmem>>, %arg7: memref<64x128xbf16, #tpu.memory_space<vmem>>, %arg8: memref<1x128xf32, #tpu.memory_space<vmem>>, %arg9: memref<1x128xbf16, #tpu.memory_space<vmem>>, %arg10: memref<1x1xf32, #tpu.memory_space<vmem>>, %arg11: memref<2x1xf32, #tpu.memory_space<vmem>>) attributes {dimension_semantics = [], scalar_prefetch = 0 : i64, scratch_operands = 0 : i64, tpu.core_type = #tpu.core_type<tc>} {
    %c0 = arith.constant 0 : index
    %c0_0 = arith.constant 0 : index
    %0 = vector.load %arg0[%c0, %c0_0] : memref<16x16xbf16, #tpu.memory_space<vmem>>, vector<16x16xbf16>
    %c0_1 = arith.constant 0 : index
    %c0_2 = arith.constant 0 : index
    %1 = vector.load %arg1[%c0_1, %c0_2] : memref<16x256xbf16, #tpu.memory_space<vmem>>, vector<16x256xbf16>
    %cst = arith.constant dense<0.000000e+00> : vector<16x256xf32>
    %2 = tpu.matmul %0, %1, %cst {dimension_numbers = #tpu.dot_dimension_numbers<[1], [0], [0], [1], [0, 0, 1, 1], [], []>} : vector<16x16xbf16>, vector<16x256xbf16>, vector<16x256xf32> -> vector<16x256xf32>
    %c0_3 = arith.constant 0 : index
    %c0_4 = arith.constant 0 : index
    %3 = vector.load %arg3[%c0_3, %c0_4] : memref<1x256xf32, #tpu.memory_space<vmem>>, vector<1x256xf32>
    %4 = vector.broadcast %3 : vector<1x256xf32> to vector<16x256xf32>
    %5 = arith.addf %2, %4 : vector<16x256xf32>
    %6 = vector.extract_strided_slice %5 {offsets = [0, 0], sizes = [16, 128], strides = [1, 1]} : vector<16x256xf32> to vector<16x128xf32>
    %7 = vector.extract_strided_slice %5 {offsets = [0, 128], sizes = [16, 128], strides = [1, 1]} : vector<16x256xf32> to vector<16x128xf32>
    %c0_5 = arith.constant 0 : index
    %c0_6 = arith.constant 0 : index
    %c0_7 = arith.constant 0 : index
    %8 = vector.load %arg2[%c0_5, %c0_6, %c0_7] : memref<2x32x128xbf16, #tpu.memory_space<vmem>>, vector<1x32x128xbf16>
    %9 = vector.shape_cast %8 : vector<1x32x128xbf16> to vector<32x128xbf16>
    %c1 = arith.constant 1 : index
    %c0_8 = arith.constant 0 : index
    %c0_9 = arith.constant 0 : index
    %10 = vector.load %arg2[%c1, %c0_8, %c0_9] : memref<2x32x128xbf16, #tpu.memory_space<vmem>>, vector<1x32x128xbf16>
    %11 = vector.shape_cast %10 : vector<1x32x128xbf16> to vector<32x128xbf16>
    %cst_10 = arith.constant 0.000000e+00 : f32
    %12 = vector.broadcast %cst_10 : f32 to vector<4x32xf32>
    %cst_11 = arith.constant 0.000000e+00 : f32
    %13 = vector.broadcast %cst_11 : f32 to vector<4x32xf32>
    %14 = vector.extract_strided_slice %6 {offsets = [0, 0], sizes = [2, 128], strides = [1, 1]} : vector<16x128xf32> to vector<2x128xf32>
    %15 = vector.extract_strided_slice %12 {offsets = [0, 0], sizes = [2, 32], strides = [1, 1]} : vector<4x32xf32> to vector<2x32xf32>
    %16 = arith.truncf %15 : vector<2x32xf32> to vector<2x32xbf16>
    %cst_12 = arith.constant dense<0.000000e+00> : vector<2x128xf32>
    %17 = tpu.matmul %16, %9, %cst_12 {dimension_numbers = #tpu.dot_dimension_numbers<[1], [0], [0], [1], [0, 0, 1, 1], [], []>} : vector<2x32xbf16>, vector<32x128xbf16>, vector<2x128xf32> -> vector<2x128xf32>
    %18 = arith.addf %14, %17 : vector<2x128xf32>
    %19 = vector.extract_strided_slice %7 {offsets = [14, 0], sizes = [2, 128], strides = [1, 1]} : vector<16x128xf32> to vector<2x128xf32>
    %20 = vector.extract_strided_slice %12 {offsets = [2, 0], sizes = [2, 32], strides = [1, 1]} : vector<4x32xf32> to vector<2x32xf32>
    %21 = arith.truncf %20 : vector<2x32xf32> to vector<2x32xbf16>
    %cst_13 = arith.constant dense<0.000000e+00> : vector<2x128xf32>
    %22 = tpu.matmul %21, %11, %cst_13 {dimension_numbers = #tpu.dot_dimension_numbers<[1], [0], [0], [1], [0, 0, 1, 1], [], []>} : vector<2x32xbf16>, vector<32x128xbf16>, vector<2x128xf32> -> vector<2x128xf32>
    %23 = arith.addf %19, %22 : vector<2x128xf32>
    %24 = tpu.concatenate %18, %23 in 0 : vector<2x128xf32>, vector<2x128xf32> -> vector<4x128xf32>
    %25 = vector.extract_strided_slice %24 {offsets = [0, 0], sizes = [4, 96], strides = [1, 1]} : vector<4x128xf32> to vector<4x96xf32>
    %26 = arith.negf %25 : vector<4x96xf32>
    %27 = math.exp %26 : vector<4x96xf32>
    %cst_14 = arith.constant 1.000000e+00 : f32
    %28 = vector.broadcast %cst_14 : f32 to vector<4x96xf32>
    %29 = arith.addf %28, %27 : vector<4x96xf32>
    %30 = arith.divf %28, %29 : vector<4x96xf32>
    %31 = vector.extract_strided_slice %24 {offsets = [0, 96], sizes = [4, 32], strides = [1, 1]} : vector<4x128xf32> to vector<4x32xf32>
    %32 = math.tanh %31 : vector<4x32xf32>
    %33 = vector.extract_strided_slice %30 {offsets = [0, 32], sizes = [4, 32], strides = [1, 1]} : vector<4x96xf32> to vector<4x32xf32>
    %34 = arith.mulf %33, %13 : vector<4x32xf32>
    %35 = vector.extract_strided_slice %30 {offsets = [0, 0], sizes = [4, 32], strides = [1, 1]} : vector<4x96xf32> to vector<4x32xf32>
    %36 = arith.mulf %35, %32 : vector<4x32xf32>
    %37 = arith.addf %34, %36 : vector<4x32xf32>
    %38 = vector.extract_strided_slice %30 {offsets = [0, 64], sizes = [4, 32], strides = [1, 1]} : vector<4x96xf32> to vector<4x32xf32>
    %39 = math.tanh %37 : vector<4x32xf32>
    %40 = arith.mulf %38, %39 : vector<4x32xf32>
    %41 = vector.extract_strided_slice %40 {offsets = [0, 0], sizes = [2, 32], strides = [1, 1]} : vector<4x32xf32> to vector<2x32xf32>
    %42 = vector.extract_strided_slice %40 {offsets = [2, 0], sizes = [2, 32], strides = [1, 1]} : vector<4x32xf32> to vector<2x32xf32>
    %43 = vector.extract_strided_slice %6 {offsets = [2, 0], sizes = [2, 128], strides = [1, 1]} : vector<16x128xf32> to vector<2x128xf32>
    %44 = vector.extract_strided_slice %40 {offsets = [0, 0], sizes = [2, 32], strides = [1, 1]} : vector<4x32xf32> to vector<2x32xf32>
    %45 = arith.truncf %44 : vector<2x32xf32> to vector<2x32xbf16>
    %cst_15 = arith.constant dense<0.000000e+00> : vector<2x128xf32>
    %46 = tpu.matmul %45, %9, %cst_15 {dimension_numbers = #tpu.dot_dimension_numbers<[1], [0], [0], [1], [0, 0, 1, 1], [], []>} : vector<2x32xbf16>, vector<32x128xbf16>, vector<2x128xf32> -> vector<2x128xf32>
    %47 = arith.addf %43, %46 : vector<2x128xf32>
    %48 = vector.extract_strided_slice %7 {offsets = [12, 0], sizes = [2, 128], strides = [1, 1]} : vector<16x128xf32> to vector<2x128xf32>
    %49 = vector.extract_strided_slice %40 {offsets = [2, 0], sizes = [2, 32], strides = [1, 1]} : vector<4x32xf32> to vector<2x32xf32>
    %50 = arith.truncf %49 : vector<2x32xf32> to vector<2x32xbf16>
    %cst_16 = arith.constant dense<0.000000e+00> : vector<2x128xf32>
    %51 = tpu.matmul %50, %11, %cst_16 {dimension_numbers = #tpu.dot_dimension_numbers<[1], [0], [0], [1], [0, 0, 1, 1], [], []>} : vector<2x32xbf16>, vector<32x128xbf16>, vector<2x128xf32> -> vector<2x128xf32>
    %52 = arith.addf %48, %51 : vector<2x128xf32>
    %53 = tpu.concatenate %47, %52 in 0 : vector<2x128xf32>, vector<2x128xf32> -> vector<4x128xf32>
    %54 = vector.extract_strided_slice %53 {offsets = [0, 0], sizes = [4, 96], strides = [1, 1]} : vector<4x128xf32> to vector<4x96xf32>
    %55 = arith.negf %54 : vector<4x96xf32>
    %56 = math.exp %55 : vector<4x96xf32>
    %cst_17 = arith.constant 1.000000e+00 : f32
    %57 = vector.broadcast %cst_17 : f32 to vector<4x96xf32>
    %58 = arith.addf %57, %56 : vector<4x96xf32>
    %59 = arith.divf %57, %58 : vector<4x96xf32>
    %60 = vector.extract_strided_slice %53 {offsets = [0, 96], sizes = [4, 32], strides = [1, 1]} : vector<4x128xf32> to vector<4x32xf32>
    %61 = math.tanh %60 : vector<4x32xf32>
    %62 = vector.extract_strided_slice %59 {offsets = [0, 32], sizes = [4, 32], strides = [1, 1]} : vector<4x96xf32> to vector<4x32xf32>
    %63 = arith.mulf %62, %37 : vector<4x32xf32>
    %64 = vector.extract_strided_slice %59 {offsets = [0, 0], sizes = [4, 32], strides = [1, 1]} : vector<4x96xf32> to vector<4x32xf32>
    %65 = arith.mulf %64, %61 : vector<4x32xf32>
    %66 = arith.addf %63, %65 : vector<4x32xf32>
    %67 = vector.extract_strided_slice %59 {offsets = [0, 64], sizes = [4, 32], strides = [1, 1]} : vector<4x96xf32> to vector<4x32xf32>
    %68 = math.tanh %66 : vector<4x32xf32>
    %69 = arith.mulf %67, %68 : vector<4x32xf32>
    %70 = vector.extract_strided_slice %69 {offsets = [0, 0], sizes = [2, 32], strides = [1, 1]} : vector<4x32xf32> to vector<2x32xf32>
    %71 = vector.extract_strided_slice %69 {offsets = [2, 0], sizes = [2, 32], strides = [1, 1]} : vector<4x32xf32> to vector<2x32xf32>
    %72 = vector.extract_strided_slice %6 {offsets = [4, 0], sizes = [2, 128], strides = [1, 1]} : vector<16x128xf32> to vector<2x128xf32>
    %73 = vector.extract_strided_slice %69 {offsets = [0, 0], sizes = [2, 32], strides = [1, 1]} : vector<4x32xf32> to vector<2x32xf32>
    %74 = arith.truncf %73 : vector<2x32xf32> to vector<2x32xbf16>
    %cst_18 = arith.constant dense<0.000000e+00> : vector<2x128xf32>
    %75 = tpu.matmul %74, %9, %cst_18 {dimension_numbers = #tpu.dot_dimension_numbers<[1], [0], [0], [1], [0, 0, 1, 1], [], []>} : vector<2x32xbf16>, vector<32x128xbf16>, vector<2x128xf32> -> vector<2x128xf32>
    %76 = arith.addf %72, %75 : vector<2x128xf32>
    %77 = vector.extract_strided_slice %7 {offsets = [10, 0], sizes = [2, 128], strides = [1, 1]} : vector<16x128xf32> to vector<2x128xf32>
    %78 = vector.extract_strided_slice %69 {offsets = [2, 0], sizes = [2, 32], strides = [1, 1]} : vector<4x32xf32> to vector<2x32xf32>
    %79 = arith.truncf %78 : vector<2x32xf32> to vector<2x32xbf16>
    %cst_19 = arith.constant dense<0.000000e+00> : vector<2x128xf32>
    %80 = tpu.matmul %79, %11, %cst_19 {dimension_numbers = #tpu.dot_dimension_numbers<[1], [0], [0], [1], [0, 0, 1, 1], [], []>} : vector<2x32xbf16>, vector<32x128xbf16>, vector<2x128xf32> -> vector<2x128xf32>
    %81 = arith.addf %77, %80 : vector<2x128xf32>
    %82 = tpu.concatenate %76, %81 in 0 : vector<2x128xf32>, vector<2x128xf32> -> vector<4x128xf32>
    %83 = vector.extract_strided_slice %82 {offsets = [0, 0], sizes = [4, 96], strides = [1, 1]} : vector<4x128xf32> to vector<4x96xf32>
    %84 = arith.negf %83 : vector<4x96xf32>
    %85 = math.exp %84 : vector<4x96xf32>
    %cst_20 = arith.constant 1.000000e+00 : f32
    %86 = vector.broadcast %cst_20 : f32 to vector<4x96xf32>
    %87 = arith.addf %86, %85 : vector<4x96xf32>
    %88 = arith.divf %86, %87 : vector<4x96xf32>
    %89 = vector.extract_strided_slice %82 {offsets = [0, 96], sizes = [4, 32], strides = [1, 1]} : vector<4x128xf32> to vector<4x32xf32>
    %90 = math.tanh %89 : vector<4x32xf32>
    %91 = vector.extract_strided_slice %88 {offsets = [0, 32], sizes = [4, 32], strides = [1, 1]} : vector<4x96xf32> to vector<4x32xf32>
    %92 = arith.mulf %91, %66 : vector<4x32xf32>
    %93 = vector.extract_strided_slice %88 {offsets = [0, 0], sizes = [4, 32], strides = [1, 1]} : vector<4x96xf32> to vector<4x32xf32>
    %94 = arith.mulf %93, %90 : vector<4x32xf32>
    %95 = arith.addf %92, %94 : vector<4x32xf32>
    %96 = vector.extract_strided_slice %88 {offsets = [0, 64], sizes = [4, 32], strides = [1, 1]} : vector<4x96xf32> to vector<4x32xf32>
    %97 = math.tanh %95 : vector<4x32xf32>
    %98 = arith.mulf %96, %97 : vector<4x32xf32>
    %99 = vector.extract_strided_slice %98 {offsets = [0, 0], sizes = [2, 32], strides = [1, 1]} : vector<4x32xf32> to vector<2x32xf32>
    %100 = vector.extract_strided_slice %98 {offsets = [2, 0], sizes = [2, 32], strides = [1, 1]} : vector<4x32xf32> to vector<2x32xf32>
    %101 = vector.extract_strided_slice %6 {offsets = [6, 0], sizes = [2, 128], strides = [1, 1]} : vector<16x128xf32> to vector<2x128xf32>
    %102 = vector.extract_strided_slice %98 {offsets = [0, 0], sizes = [2, 32], strides = [1, 1]} : vector<4x32xf32> to vector<2x32xf32>
    %103 = arith.truncf %102 : vector<2x32xf32> to vector<2x32xbf16>
    %cst_21 = arith.constant dense<0.000000e+00> : vector<2x128xf32>
    %104 = tpu.matmul %103, %9, %cst_21 {dimension_numbers = #tpu.dot_dimension_numbers<[1], [0], [0], [1], [0, 0, 1, 1], [], []>} : vector<2x32xbf16>, vector<32x128xbf16>, vector<2x128xf32> -> vector<2x128xf32>
    %105 = arith.addf %101, %104 : vector<2x128xf32>
    %106 = vector.extract_strided_slice %7 {offsets = [8, 0], sizes = [2, 128], strides = [1, 1]} : vector<16x128xf32> to vector<2x128xf32>
    %107 = vector.extract_strided_slice %98 {offsets = [2, 0], sizes = [2, 32], strides = [1, 1]} : vector<4x32xf32> to vector<2x32xf32>
    %108 = arith.truncf %107 : vector<2x32xf32> to vector<2x32xbf16>
    %cst_22 = arith.constant dense<0.000000e+00> : vector<2x128xf32>
    %109 = tpu.matmul %108, %11, %cst_22 {dimension_numbers = #tpu.dot_dimension_numbers<[1], [0], [0], [1], [0, 0, 1, 1], [], []>} : vector<2x32xbf16>, vector<32x128xbf16>, vector<2x128xf32> -> vector<2x128xf32>
    %110 = arith.addf %106, %109 : vector<2x128xf32>
    %111 = tpu.concatenate %105, %110 in 0 : vector<2x128xf32>, vector<2x128xf32> -> vector<4x128xf32>
    %112 = vector.extract_strided_slice %111 {offsets = [0, 0], sizes = [4, 96], strides = [1, 1]} : vector<4x128xf32> to vector<4x96xf32>
    %113 = arith.negf %112 : vector<4x96xf32>
    %114 = math.exp %113 : vector<4x96xf32>
    %cst_23 = arith.constant 1.000000e+00 : f32
    %115 = vector.broadcast %cst_23 : f32 to vector<4x96xf32>
    %116 = arith.addf %115, %114 : vector<4x96xf32>
    %117 = arith.divf %115, %116 : vector<4x96xf32>
    %118 = vector.extract_strided_slice %111 {offsets = [0, 96], sizes = [4, 32], strides = [1, 1]} : vector<4x128xf32> to vector<4x32xf32>
    %119 = math.tanh %118 : vector<4x32xf32>
    %120 = vector.extract_strided_slice %117 {offsets = [0, 32], sizes = [4, 32], strides = [1, 1]} : vector<4x96xf32> to vector<4x32xf32>
    %121 = arith.mulf %120, %95 : vector<4x32xf32>
    %122 = vector.extract_strided_slice %117 {offsets = [0, 0], sizes = [4, 32], strides = [1, 1]} : vector<4x96xf32> to vector<4x32xf32>
    %123 = arith.mulf %122, %119 : vector<4x32xf32>
    %124 = arith.addf %121, %123 : vector<4x32xf32>
    %125 = vector.extract_strided_slice %117 {offsets = [0, 64], sizes = [4, 32], strides = [1, 1]} : vector<4x96xf32> to vector<4x32xf32>
    %126 = math.tanh %124 : vector<4x32xf32>
    %127 = arith.mulf %125, %126 : vector<4x32xf32>
    %128 = vector.extract_strided_slice %127 {offsets = [0, 0], sizes = [2, 32], strides = [1, 1]} : vector<4x32xf32> to vector<2x32xf32>
    %129 = vector.extract_strided_slice %127 {offsets = [2, 0], sizes = [2, 32], strides = [1, 1]} : vector<4x32xf32> to vector<2x32xf32>
    %130 = vector.extract_strided_slice %6 {offsets = [8, 0], sizes = [2, 128], strides = [1, 1]} : vector<16x128xf32> to vector<2x128xf32>
    %131 = vector.extract_strided_slice %127 {offsets = [0, 0], sizes = [2, 32], strides = [1, 1]} : vector<4x32xf32> to vector<2x32xf32>
    %132 = arith.truncf %131 : vector<2x32xf32> to vector<2x32xbf16>
    %cst_24 = arith.constant dense<0.000000e+00> : vector<2x128xf32>
    %133 = tpu.matmul %132, %9, %cst_24 {dimension_numbers = #tpu.dot_dimension_numbers<[1], [0], [0], [1], [0, 0, 1, 1], [], []>} : vector<2x32xbf16>, vector<32x128xbf16>, vector<2x128xf32> -> vector<2x128xf32>
    %134 = arith.addf %130, %133 : vector<2x128xf32>
    %135 = vector.extract_strided_slice %7 {offsets = [6, 0], sizes = [2, 128], strides = [1, 1]} : vector<16x128xf32> to vector<2x128xf32>
    %136 = vector.extract_strided_slice %127 {offsets = [2, 0], sizes = [2, 32], strides = [1, 1]} : vector<4x32xf32> to vector<2x32xf32>
    %137 = arith.truncf %136 : vector<2x32xf32> to vector<2x32xbf16>
    %cst_25 = arith.constant dense<0.000000e+00> : vector<2x128xf32>
    %138 = tpu.matmul %137, %11, %cst_25 {dimension_numbers = #tpu.dot_dimension_numbers<[1], [0], [0], [1], [0, 0, 1, 1], [], []>} : vector<2x32xbf16>, vector<32x128xbf16>, vector<2x128xf32> -> vector<2x128xf32>
    %139 = arith.addf %135, %138 : vector<2x128xf32>
    %140 = tpu.concatenate %134, %139 in 0 : vector<2x128xf32>, vector<2x128xf32> -> vector<4x128xf32>
    %141 = vector.extract_strided_slice %140 {offsets = [0, 0], sizes = [4, 96], strides = [1, 1]} : vector<4x128xf32> to vector<4x96xf32>
    %142 = arith.negf %141 : vector<4x96xf32>
    %143 = math.exp %142 : vector<4x96xf32>
    %cst_26 = arith.constant 1.000000e+00 : f32
    %144 = vector.broadcast %cst_26 : f32 to vector<4x96xf32>
    %145 = arith.addf %144, %143 : vector<4x96xf32>
    %146 = arith.divf %144, %145 : vector<4x96xf32>
    %147 = vector.extract_strided_slice %140 {offsets = [0, 96], sizes = [4, 32], strides = [1, 1]} : vector<4x128xf32> to vector<4x32xf32>
    %148 = math.tanh %147 : vector<4x32xf32>
    %149 = vector.extract_strided_slice %146 {offsets = [0, 32], sizes = [4, 32], strides = [1, 1]} : vector<4x96xf32> to vector<4x32xf32>
    %150 = arith.mulf %149, %124 : vector<4x32xf32>
    %151 = vector.extract_strided_slice %146 {offsets = [0, 0], sizes = [4, 32], strides = [1, 1]} : vector<4x96xf32> to vector<4x32xf32>
    %152 = arith.mulf %151, %148 : vector<4x32xf32>
    %153 = arith.addf %150, %152 : vector<4x32xf32>
    %154 = vector.extract_strided_slice %146 {offsets = [0, 64], sizes = [4, 32], strides = [1, 1]} : vector<4x96xf32> to vector<4x32xf32>
    %155 = math.tanh %153 : vector<4x32xf32>
    %156 = arith.mulf %154, %155 : vector<4x32xf32>
    %157 = vector.extract_strided_slice %156 {offsets = [0, 0], sizes = [2, 32], strides = [1, 1]} : vector<4x32xf32> to vector<2x32xf32>
    %158 = vector.extract_strided_slice %156 {offsets = [2, 0], sizes = [2, 32], strides = [1, 1]} : vector<4x32xf32> to vector<2x32xf32>
    %159 = vector.extract_strided_slice %6 {offsets = [10, 0], sizes = [2, 128], strides = [1, 1]} : vector<16x128xf32> to vector<2x128xf32>
    %160 = vector.extract_strided_slice %156 {offsets = [0, 0], sizes = [2, 32], strides = [1, 1]} : vector<4x32xf32> to vector<2x32xf32>
    %161 = arith.truncf %160 : vector<2x32xf32> to vector<2x32xbf16>
    %cst_27 = arith.constant dense<0.000000e+00> : vector<2x128xf32>
    %162 = tpu.matmul %161, %9, %cst_27 {dimension_numbers = #tpu.dot_dimension_numbers<[1], [0], [0], [1], [0, 0, 1, 1], [], []>} : vector<2x32xbf16>, vector<32x128xbf16>, vector<2x128xf32> -> vector<2x128xf32>
    %163 = arith.addf %159, %162 : vector<2x128xf32>
    %164 = vector.extract_strided_slice %7 {offsets = [4, 0], sizes = [2, 128], strides = [1, 1]} : vector<16x128xf32> to vector<2x128xf32>
    %165 = vector.extract_strided_slice %156 {offsets = [2, 0], sizes = [2, 32], strides = [1, 1]} : vector<4x32xf32> to vector<2x32xf32>
    %166 = arith.truncf %165 : vector<2x32xf32> to vector<2x32xbf16>
    %cst_28 = arith.constant dense<0.000000e+00> : vector<2x128xf32>
    %167 = tpu.matmul %166, %11, %cst_28 {dimension_numbers = #tpu.dot_dimension_numbers<[1], [0], [0], [1], [0, 0, 1, 1], [], []>} : vector<2x32xbf16>, vector<32x128xbf16>, vector<2x128xf32> -> vector<2x128xf32>
    %168 = arith.addf %164, %167 : vector<2x128xf32>
    %169 = tpu.concatenate %163, %168 in 0 : vector<2x128xf32>, vector<2x128xf32> -> vector<4x128xf32>
    %170 = vector.extract_strided_slice %169 {offsets = [0, 0], sizes = [4, 96], strides = [1, 1]} : vector<4x128xf32> to vector<4x96xf32>
    %171 = arith.negf %170 : vector<4x96xf32>
    %172 = math.exp %171 : vector<4x96xf32>
    %cst_29 = arith.constant 1.000000e+00 : f32
    %173 = vector.broadcast %cst_29 : f32 to vector<4x96xf32>
    %174 = arith.addf %173, %172 : vector<4x96xf32>
    %175 = arith.divf %173, %174 : vector<4x96xf32>
    %176 = vector.extract_strided_slice %169 {offsets = [0, 96], sizes = [4, 32], strides = [1, 1]} : vector<4x128xf32> to vector<4x32xf32>
    %177 = math.tanh %176 : vector<4x32xf32>
    %178 = vector.extract_strided_slice %175 {offsets = [0, 32], sizes = [4, 32], strides = [1, 1]} : vector<4x96xf32> to vector<4x32xf32>
    %179 = arith.mulf %178, %153 : vector<4x32xf32>
    %180 = vector.extract_strided_slice %175 {offsets = [0, 0], sizes = [4, 32], strides = [1, 1]} : vector<4x96xf32> to vector<4x32xf32>
    %181 = arith.mulf %180, %177 : vector<4x32xf32>
    %182 = arith.addf %179, %181 : vector<4x32xf32>
    %183 = vector.extract_strided_slice %175 {offsets = [0, 64], sizes = [4, 32], strides = [1, 1]} : vector<4x96xf32> to vector<4x32xf32>
    %184 = math.tanh %182 : vector<4x32xf32>
    %185 = arith.mulf %183, %184 : vector<4x32xf32>
    %186 = vector.extract_strided_slice %185 {offsets = [0, 0], sizes = [2, 32], strides = [1, 1]} : vector<4x32xf32> to vector<2x32xf32>
    %187 = vector.extract_strided_slice %185 {offsets = [2, 0], sizes = [2, 32], strides = [1, 1]} : vector<4x32xf32> to vector<2x32xf32>
    %188 = vector.extract_strided_slice %6 {offsets = [12, 0], sizes = [2, 128], strides = [1, 1]} : vector<16x128xf32> to vector<2x128xf32>
    %189 = vector.extract_strided_slice %185 {offsets = [0, 0], sizes = [2, 32], strides = [1, 1]} : vector<4x32xf32> to vector<2x32xf32>
    %190 = arith.truncf %189 : vector<2x32xf32> to vector<2x32xbf16>
    %cst_30 = arith.constant dense<0.000000e+00> : vector<2x128xf32>
    %191 = tpu.matmul %190, %9, %cst_30 {dimension_numbers = #tpu.dot_dimension_numbers<[1], [0], [0], [1], [0, 0, 1, 1], [], []>} : vector<2x32xbf16>, vector<32x128xbf16>, vector<2x128xf32> -> vector<2x128xf32>
    %192 = arith.addf %188, %191 : vector<2x128xf32>
    %193 = vector.extract_strided_slice %7 {offsets = [2, 0], sizes = [2, 128], strides = [1, 1]} : vector<16x128xf32> to vector<2x128xf32>
    %194 = vector.extract_strided_slice %185 {offsets = [2, 0], sizes = [2, 32], strides = [1, 1]} : vector<4x32xf32> to vector<2x32xf32>
    %195 = arith.truncf %194 : vector<2x32xf32> to vector<2x32xbf16>
    %cst_31 = arith.constant dense<0.000000e+00> : vector<2x128xf32>
    %196 = tpu.matmul %195, %11, %cst_31 {dimension_numbers = #tpu.dot_dimension_numbers<[1], [0], [0], [1], [0, 0, 1, 1], [], []>} : vector<2x32xbf16>, vector<32x128xbf16>, vector<2x128xf32> -> vector<2x128xf32>
    %197 = arith.addf %193, %196 : vector<2x128xf32>
    %198 = tpu.concatenate %192, %197 in 0 : vector<2x128xf32>, vector<2x128xf32> -> vector<4x128xf32>
    %199 = vector.extract_strided_slice %198 {offsets = [0, 0], sizes = [4, 96], strides = [1, 1]} : vector<4x128xf32> to vector<4x96xf32>
    %200 = arith.negf %199 : vector<4x96xf32>
    %201 = math.exp %200 : vector<4x96xf32>
    %cst_32 = arith.constant 1.000000e+00 : f32
    %202 = vector.broadcast %cst_32 : f32 to vector<4x96xf32>
    %203 = arith.addf %202, %201 : vector<4x96xf32>
    %204 = arith.divf %202, %203 : vector<4x96xf32>
    %205 = vector.extract_strided_slice %198 {offsets = [0, 96], sizes = [4, 32], strides = [1, 1]} : vector<4x128xf32> to vector<4x32xf32>
    %206 = math.tanh %205 : vector<4x32xf32>
    %207 = vector.extract_strided_slice %204 {offsets = [0, 32], sizes = [4, 32], strides = [1, 1]} : vector<4x96xf32> to vector<4x32xf32>
    %208 = arith.mulf %207, %182 : vector<4x32xf32>
    %209 = vector.extract_strided_slice %204 {offsets = [0, 0], sizes = [4, 32], strides = [1, 1]} : vector<4x96xf32> to vector<4x32xf32>
    %210 = arith.mulf %209, %206 : vector<4x32xf32>
    %211 = arith.addf %208, %210 : vector<4x32xf32>
    %212 = vector.extract_strided_slice %204 {offsets = [0, 64], sizes = [4, 32], strides = [1, 1]} : vector<4x96xf32> to vector<4x32xf32>
    %213 = math.tanh %211 : vector<4x32xf32>
    %214 = arith.mulf %212, %213 : vector<4x32xf32>
    %215 = vector.extract_strided_slice %214 {offsets = [0, 0], sizes = [2, 32], strides = [1, 1]} : vector<4x32xf32> to vector<2x32xf32>
    %216 = vector.extract_strided_slice %214 {offsets = [2, 0], sizes = [2, 32], strides = [1, 1]} : vector<4x32xf32> to vector<2x32xf32>
    %217 = vector.extract_strided_slice %6 {offsets = [14, 0], sizes = [2, 128], strides = [1, 1]} : vector<16x128xf32> to vector<2x128xf32>
    %218 = vector.extract_strided_slice %214 {offsets = [0, 0], sizes = [2, 32], strides = [1, 1]} : vector<4x32xf32> to vector<2x32xf32>
    %219 = arith.truncf %218 : vector<2x32xf32> to vector<2x32xbf16>
    %cst_33 = arith.constant dense<0.000000e+00> : vector<2x128xf32>
    %220 = tpu.matmul %219, %9, %cst_33 {dimension_numbers = #tpu.dot_dimension_numbers<[1], [0], [0], [1], [0, 0, 1, 1], [], []>} : vector<2x32xbf16>, vector<32x128xbf16>, vector<2x128xf32> -> vector<2x128xf32>
    %221 = arith.addf %217, %220 : vector<2x128xf32>
    %222 = vector.extract_strided_slice %7 {offsets = [0, 0], sizes = [2, 128], strides = [1, 1]} : vector<16x128xf32> to vector<2x128xf32>
    %223 = vector.extract_strided_slice %214 {offsets = [2, 0], sizes = [2, 32], strides = [1, 1]} : vector<4x32xf32> to vector<2x32xf32>
    %224 = arith.truncf %223 : vector<2x32xf32> to vector<2x32xbf16>
    %cst_34 = arith.constant dense<0.000000e+00> : vector<2x128xf32>
    %225 = tpu.matmul %224, %11, %cst_34 {dimension_numbers = #tpu.dot_dimension_numbers<[1], [0], [0], [1], [0, 0, 1, 1], [], []>} : vector<2x32xbf16>, vector<32x128xbf16>, vector<2x128xf32> -> vector<2x128xf32>
    %226 = arith.addf %222, %225 : vector<2x128xf32>
    %227 = tpu.concatenate %221, %226 in 0 : vector<2x128xf32>, vector<2x128xf32> -> vector<4x128xf32>
    %228 = vector.extract_strided_slice %227 {offsets = [0, 0], sizes = [4, 96], strides = [1, 1]} : vector<4x128xf32> to vector<4x96xf32>
    %229 = arith.negf %228 : vector<4x96xf32>
    %230 = math.exp %229 : vector<4x96xf32>
    %cst_35 = arith.constant 1.000000e+00 : f32
    %231 = vector.broadcast %cst_35 : f32 to vector<4x96xf32>
    %232 = arith.addf %231, %230 : vector<4x96xf32>
    %233 = arith.divf %231, %232 : vector<4x96xf32>
    %234 = vector.extract_strided_slice %227 {offsets = [0, 96], sizes = [4, 32], strides = [1, 1]} : vector<4x128xf32> to vector<4x32xf32>
    %235 = math.tanh %234 : vector<4x32xf32>
    %236 = vector.extract_strided_slice %233 {offsets = [0, 32], sizes = [4, 32], strides = [1, 1]} : vector<4x96xf32> to vector<4x32xf32>
    %237 = arith.mulf %236, %211 : vector<4x32xf32>
    %238 = vector.extract_strided_slice %233 {offsets = [0, 0], sizes = [4, 32], strides = [1, 1]} : vector<4x96xf32> to vector<4x32xf32>
    %239 = arith.mulf %238, %235 : vector<4x32xf32>
    %240 = arith.addf %237, %239 : vector<4x32xf32>
    %241 = vector.extract_strided_slice %233 {offsets = [0, 64], sizes = [4, 32], strides = [1, 1]} : vector<4x96xf32> to vector<4x32xf32>
    %242 = math.tanh %240 : vector<4x32xf32>
    %243 = arith.mulf %241, %242 : vector<4x32xf32>
    %244 = vector.extract_strided_slice %243 {offsets = [0, 0], sizes = [2, 32], strides = [1, 1]} : vector<4x32xf32> to vector<2x32xf32>
    %245 = vector.extract_strided_slice %243 {offsets = [2, 0], sizes = [2, 32], strides = [1, 1]} : vector<4x32xf32> to vector<2x32xf32>
    %246 = tpu.concatenate %41, %245 in 1 : vector<2x32xf32>, vector<2x32xf32> -> vector<2x64xf32>
    %247 = tpu.concatenate %70, %216 in 1 : vector<2x32xf32>, vector<2x32xf32> -> vector<2x64xf32>
    %248 = tpu.concatenate %99, %187 in 1 : vector<2x32xf32>, vector<2x32xf32> -> vector<2x64xf32>
    %249 = tpu.concatenate %128, %158 in 1 : vector<2x32xf32>, vector<2x32xf32> -> vector<2x64xf32>
    %250 = tpu.concatenate %157, %129 in 1 : vector<2x32xf32>, vector<2x32xf32> -> vector<2x64xf32>
    %251 = tpu.concatenate %186, %100 in 1 : vector<2x32xf32>, vector<2x32xf32> -> vector<2x64xf32>
    %252 = tpu.concatenate %215, %71 in 1 : vector<2x32xf32>, vector<2x32xf32> -> vector<2x64xf32>
    %253 = tpu.concatenate %244, %42 in 1 : vector<2x32xf32>, vector<2x32xf32> -> vector<2x64xf32>
    %254 = tpu.concatenate %246, %247, %248, %249, %250, %251, %252, %253 in 0 : vector<2x64xf32>, vector<2x64xf32>, vector<2x64xf32>, vector<2x64xf32>, vector<2x64xf32>, vector<2x64xf32>, vector<2x64xf32>, vector<2x64xf32> -> vector<16x64xf32>
    %c0_36 = arith.constant 0 : index
    %c0_37 = arith.constant 0 : index
    %c0_38 = arith.constant 0 : index
    %255 = vector.load %arg4[%c0_36, %c0_37, %c0_38] : memref<2x64x128xbf16, #tpu.memory_space<vmem>>, vector<1x64x128xbf16>
    %256 = vector.shape_cast %255 : vector<1x64x128xbf16> to vector<64x128xbf16>
    %257 = arith.truncf %254 : vector<16x64xf32> to vector<16x64xbf16>
    %cst_39 = arith.constant dense<0.000000e+00> : vector<16x128xf32>
    %258 = tpu.matmul %257, %256, %cst_39 {dimension_numbers = #tpu.dot_dimension_numbers<[1], [0], [0], [1], [0, 0, 1, 1], [], []>} : vector<16x64xbf16>, vector<64x128xbf16>, vector<16x128xf32> -> vector<16x128xf32>
    %c0_40 = arith.constant 0 : index
    %c0_41 = arith.constant 0 : index
    %c0_42 = arith.constant 0 : index
    %259 = vector.load %arg6[%c0_40, %c0_41, %c0_42] : memref<2x1x128xf32, #tpu.memory_space<vmem>>, vector<1x1x128xf32>
    %260 = vector.shape_cast %259 : vector<1x1x128xf32> to vector<1x128xf32>
    %261 = vector.broadcast %260 : vector<1x128xf32> to vector<16x128xf32>
    %262 = arith.addf %258, %261 : vector<16x128xf32>
    %c0_43 = arith.constant 0 : index
    %c0_44 = arith.constant 0 : index
    %263 = vector.load %arg5[%c0_43, %c0_44] : memref<32x128xbf16, #tpu.memory_space<vmem>>, vector<32x128xbf16>
    %cst_45 = arith.constant 0.000000e+00 : f32
    %264 = vector.broadcast %cst_45 : f32 to vector<2x32xf32>
    %cst_46 = arith.constant 0.000000e+00 : f32
    %265 = vector.broadcast %cst_46 : f32 to vector<2x32xf32>
    %266 = vector.extract_strided_slice %262 {offsets = [0, 0], sizes = [2, 128], strides = [1, 1]} : vector<16x128xf32> to vector<2x128xf32>
    %267 = arith.truncf %264 : vector<2x32xf32> to vector<2x32xbf16>
    %cst_47 = arith.constant dense<0.000000e+00> : vector<2x128xf32>
    %268 = tpu.matmul %267, %263, %cst_47 {dimension_numbers = #tpu.dot_dimension_numbers<[1], [0], [0], [1], [0, 0, 1, 1], [], []>} : vector<2x32xbf16>, vector<32x128xbf16>, vector<2x128xf32> -> vector<2x128xf32>
    %269 = arith.addf %266, %268 : vector<2x128xf32>
    %270 = vector.extract_strided_slice %269 {offsets = [0, 0], sizes = [2, 96], strides = [1, 1]} : vector<2x128xf32> to vector<2x96xf32>
    %271 = arith.negf %270 : vector<2x96xf32>
    %272 = math.exp %271 : vector<2x96xf32>
    %cst_48 = arith.constant 1.000000e+00 : f32
    %273 = vector.broadcast %cst_48 : f32 to vector<2x96xf32>
    %274 = arith.addf %273, %272 : vector<2x96xf32>
    %275 = arith.divf %273, %274 : vector<2x96xf32>
    %276 = vector.extract_strided_slice %269 {offsets = [0, 96], sizes = [2, 32], strides = [1, 1]} : vector<2x128xf32> to vector<2x32xf32>
    %277 = math.tanh %276 : vector<2x32xf32>
    %278 = vector.extract_strided_slice %275 {offsets = [0, 32], sizes = [2, 32], strides = [1, 1]} : vector<2x96xf32> to vector<2x32xf32>
    %279 = arith.mulf %278, %265 : vector<2x32xf32>
    %280 = vector.extract_strided_slice %275 {offsets = [0, 0], sizes = [2, 32], strides = [1, 1]} : vector<2x96xf32> to vector<2x32xf32>
    %281 = arith.mulf %280, %277 : vector<2x32xf32>
    %282 = arith.addf %279, %281 : vector<2x32xf32>
    %283 = vector.extract_strided_slice %275 {offsets = [0, 64], sizes = [2, 32], strides = [1, 1]} : vector<2x96xf32> to vector<2x32xf32>
    %284 = math.tanh %282 : vector<2x32xf32>
    %285 = arith.mulf %283, %284 : vector<2x32xf32>
    %286 = vector.extract_strided_slice %262 {offsets = [2, 0], sizes = [2, 128], strides = [1, 1]} : vector<16x128xf32> to vector<2x128xf32>
    %287 = arith.truncf %285 : vector<2x32xf32> to vector<2x32xbf16>
    %cst_49 = arith.constant dense<0.000000e+00> : vector<2x128xf32>
    %288 = tpu.matmul %287, %263, %cst_49 {dimension_numbers = #tpu.dot_dimension_numbers<[1], [0], [0], [1], [0, 0, 1, 1], [], []>} : vector<2x32xbf16>, vector<32x128xbf16>, vector<2x128xf32> -> vector<2x128xf32>
    %289 = arith.addf %286, %288 : vector<2x128xf32>
    %290 = vector.extract_strided_slice %289 {offsets = [0, 0], sizes = [2, 96], strides = [1, 1]} : vector<2x128xf32> to vector<2x96xf32>
    %291 = arith.negf %290 : vector<2x96xf32>
    %292 = math.exp %291 : vector<2x96xf32>
    %cst_50 = arith.constant 1.000000e+00 : f32
    %293 = vector.broadcast %cst_50 : f32 to vector<2x96xf32>
    %294 = arith.addf %293, %292 : vector<2x96xf32>
    %295 = arith.divf %293, %294 : vector<2x96xf32>
    %296 = vector.extract_strided_slice %289 {offsets = [0, 96], sizes = [2, 32], strides = [1, 1]} : vector<2x128xf32> to vector<2x32xf32>
    %297 = math.tanh %296 : vector<2x32xf32>
    %298 = vector.extract_strided_slice %295 {offsets = [0, 32], sizes = [2, 32], strides = [1, 1]} : vector<2x96xf32> to vector<2x32xf32>
    %299 = arith.mulf %298, %282 : vector<2x32xf32>
    %300 = vector.extract_strided_slice %295 {offsets = [0, 0], sizes = [2, 32], strides = [1, 1]} : vector<2x96xf32> to vector<2x32xf32>
    %301 = arith.mulf %300, %297 : vector<2x32xf32>
    %302 = arith.addf %299, %301 : vector<2x32xf32>
    %303 = vector.extract_strided_slice %295 {offsets = [0, 64], sizes = [2, 32], strides = [1, 1]} : vector<2x96xf32> to vector<2x32xf32>
    %304 = math.tanh %302 : vector<2x32xf32>
    %305 = arith.mulf %303, %304 : vector<2x32xf32>
    %306 = vector.extract_strided_slice %262 {offsets = [4, 0], sizes = [2, 128], strides = [1, 1]} : vector<16x128xf32> to vector<2x128xf32>
    %307 = arith.truncf %305 : vector<2x32xf32> to vector<2x32xbf16>
    %cst_51 = arith.constant dense<0.000000e+00> : vector<2x128xf32>
    %308 = tpu.matmul %307, %263, %cst_51 {dimension_numbers = #tpu.dot_dimension_numbers<[1], [0], [0], [1], [0, 0, 1, 1], [], []>} : vector<2x32xbf16>, vector<32x128xbf16>, vector<2x128xf32> -> vector<2x128xf32>
    %309 = arith.addf %306, %308 : vector<2x128xf32>
    %310 = vector.extract_strided_slice %309 {offsets = [0, 0], sizes = [2, 96], strides = [1, 1]} : vector<2x128xf32> to vector<2x96xf32>
    %311 = arith.negf %310 : vector<2x96xf32>
    %312 = math.exp %311 : vector<2x96xf32>
    %cst_52 = arith.constant 1.000000e+00 : f32
    %313 = vector.broadcast %cst_52 : f32 to vector<2x96xf32>
    %314 = arith.addf %313, %312 : vector<2x96xf32>
    %315 = arith.divf %313, %314 : vector<2x96xf32>
    %316 = vector.extract_strided_slice %309 {offsets = [0, 96], sizes = [2, 32], strides = [1, 1]} : vector<2x128xf32> to vector<2x32xf32>
    %317 = math.tanh %316 : vector<2x32xf32>
    %318 = vector.extract_strided_slice %315 {offsets = [0, 32], sizes = [2, 32], strides = [1, 1]} : vector<2x96xf32> to vector<2x32xf32>
    %319 = arith.mulf %318, %302 : vector<2x32xf32>
    %320 = vector.extract_strided_slice %315 {offsets = [0, 0], sizes = [2, 32], strides = [1, 1]} : vector<2x96xf32> to vector<2x32xf32>
    %321 = arith.mulf %320, %317 : vector<2x32xf32>
    %322 = arith.addf %319, %321 : vector<2x32xf32>
    %323 = vector.extract_strided_slice %315 {offsets = [0, 64], sizes = [2, 32], strides = [1, 1]} : vector<2x96xf32> to vector<2x32xf32>
    %324 = math.tanh %322 : vector<2x32xf32>
    %325 = arith.mulf %323, %324 : vector<2x32xf32>
    %326 = vector.extract_strided_slice %262 {offsets = [6, 0], sizes = [2, 128], strides = [1, 1]} : vector<16x128xf32> to vector<2x128xf32>
    %327 = arith.truncf %325 : vector<2x32xf32> to vector<2x32xbf16>
    %cst_53 = arith.constant dense<0.000000e+00> : vector<2x128xf32>
    %328 = tpu.matmul %327, %263, %cst_53 {dimension_numbers = #tpu.dot_dimension_numbers<[1], [0], [0], [1], [0, 0, 1, 1], [], []>} : vector<2x32xbf16>, vector<32x128xbf16>, vector<2x128xf32> -> vector<2x128xf32>
    %329 = arith.addf %326, %328 : vector<2x128xf32>
    %330 = vector.extract_strided_slice %329 {offsets = [0, 0], sizes = [2, 96], strides = [1, 1]} : vector<2x128xf32> to vector<2x96xf32>
    %331 = arith.negf %330 : vector<2x96xf32>
    %332 = math.exp %331 : vector<2x96xf32>
    %cst_54 = arith.constant 1.000000e+00 : f32
    %333 = vector.broadcast %cst_54 : f32 to vector<2x96xf32>
    %334 = arith.addf %333, %332 : vector<2x96xf32>
    %335 = arith.divf %333, %334 : vector<2x96xf32>
    %336 = vector.extract_strided_slice %329 {offsets = [0, 96], sizes = [2, 32], strides = [1, 1]} : vector<2x128xf32> to vector<2x32xf32>
    %337 = math.tanh %336 : vector<2x32xf32>
    %338 = vector.extract_strided_slice %335 {offsets = [0, 32], sizes = [2, 32], strides = [1, 1]} : vector<2x96xf32> to vector<2x32xf32>
    %339 = arith.mulf %338, %322 : vector<2x32xf32>
    %340 = vector.extract_strided_slice %335 {offsets = [0, 0], sizes = [2, 32], strides = [1, 1]} : vector<2x96xf32> to vector<2x32xf32>
    %341 = arith.mulf %340, %337 : vector<2x32xf32>
    %342 = arith.addf %339, %341 : vector<2x32xf32>
    %343 = vector.extract_strided_slice %335 {offsets = [0, 64], sizes = [2, 32], strides = [1, 1]} : vector<2x96xf32> to vector<2x32xf32>
    %344 = math.tanh %342 : vector<2x32xf32>
    %345 = arith.mulf %343, %344 : vector<2x32xf32>
    %346 = vector.extract_strided_slice %262 {offsets = [8, 0], sizes = [2, 128], strides = [1, 1]} : vector<16x128xf32> to vector<2x128xf32>
    %347 = arith.truncf %345 : vector<2x32xf32> to vector<2x32xbf16>
    %cst_55 = arith.constant dense<0.000000e+00> : vector<2x128xf32>
    %348 = tpu.matmul %347, %263, %cst_55 {dimension_numbers = #tpu.dot_dimension_numbers<[1], [0], [0], [1], [0, 0, 1, 1], [], []>} : vector<2x32xbf16>, vector<32x128xbf16>, vector<2x128xf32> -> vector<2x128xf32>
    %349 = arith.addf %346, %348 : vector<2x128xf32>
    %350 = vector.extract_strided_slice %349 {offsets = [0, 0], sizes = [2, 96], strides = [1, 1]} : vector<2x128xf32> to vector<2x96xf32>
    %351 = arith.negf %350 : vector<2x96xf32>
    %352 = math.exp %351 : vector<2x96xf32>
    %cst_56 = arith.constant 1.000000e+00 : f32
    %353 = vector.broadcast %cst_56 : f32 to vector<2x96xf32>
    %354 = arith.addf %353, %352 : vector<2x96xf32>
    %355 = arith.divf %353, %354 : vector<2x96xf32>
    %356 = vector.extract_strided_slice %349 {offsets = [0, 96], sizes = [2, 32], strides = [1, 1]} : vector<2x128xf32> to vector<2x32xf32>
    %357 = math.tanh %356 : vector<2x32xf32>
    %358 = vector.extract_strided_slice %355 {offsets = [0, 32], sizes = [2, 32], strides = [1, 1]} : vector<2x96xf32> to vector<2x32xf32>
    %359 = arith.mulf %358, %342 : vector<2x32xf32>
    %360 = vector.extract_strided_slice %355 {offsets = [0, 0], sizes = [2, 32], strides = [1, 1]} : vector<2x96xf32> to vector<2x32xf32>
    %361 = arith.mulf %360, %357 : vector<2x32xf32>
    %362 = arith.addf %359, %361 : vector<2x32xf32>
    %363 = vector.extract_strided_slice %355 {offsets = [0, 64], sizes = [2, 32], strides = [1, 1]} : vector<2x96xf32> to vector<2x32xf32>
    %364 = math.tanh %362 : vector<2x32xf32>
    %365 = arith.mulf %363, %364 : vector<2x32xf32>
    %366 = vector.extract_strided_slice %262 {offsets = [10, 0], sizes = [2, 128], strides = [1, 1]} : vector<16x128xf32> to vector<2x128xf32>
    %367 = arith.truncf %365 : vector<2x32xf32> to vector<2x32xbf16>
    %cst_57 = arith.constant dense<0.000000e+00> : vector<2x128xf32>
    %368 = tpu.matmul %367, %263, %cst_57 {dimension_numbers = #tpu.dot_dimension_numbers<[1], [0], [0], [1], [0, 0, 1, 1], [], []>} : vector<2x32xbf16>, vector<32x128xbf16>, vector<2x128xf32> -> vector<2x128xf32>
    %369 = arith.addf %366, %368 : vector<2x128xf32>
    %370 = vector.extract_strided_slice %369 {offsets = [0, 0], sizes = [2, 96], strides = [1, 1]} : vector<2x128xf32> to vector<2x96xf32>
    %371 = arith.negf %370 : vector<2x96xf32>
    %372 = math.exp %371 : vector<2x96xf32>
    %cst_58 = arith.constant 1.000000e+00 : f32
    %373 = vector.broadcast %cst_58 : f32 to vector<2x96xf32>
    %374 = arith.addf %373, %372 : vector<2x96xf32>
    %375 = arith.divf %373, %374 : vector<2x96xf32>
    %376 = vector.extract_strided_slice %369 {offsets = [0, 96], sizes = [2, 32], strides = [1, 1]} : vector<2x128xf32> to vector<2x32xf32>
    %377 = math.tanh %376 : vector<2x32xf32>
    %378 = vector.extract_strided_slice %375 {offsets = [0, 32], sizes = [2, 32], strides = [1, 1]} : vector<2x96xf32> to vector<2x32xf32>
    %379 = arith.mulf %378, %362 : vector<2x32xf32>
    %380 = vector.extract_strided_slice %375 {offsets = [0, 0], sizes = [2, 32], strides = [1, 1]} : vector<2x96xf32> to vector<2x32xf32>
    %381 = arith.mulf %380, %377 : vector<2x32xf32>
    %382 = arith.addf %379, %381 : vector<2x32xf32>
    %383 = vector.extract_strided_slice %375 {offsets = [0, 64], sizes = [2, 32], strides = [1, 1]} : vector<2x96xf32> to vector<2x32xf32>
    %384 = math.tanh %382 : vector<2x32xf32>
    %385 = arith.mulf %383, %384 : vector<2x32xf32>
    %386 = vector.extract_strided_slice %262 {offsets = [12, 0], sizes = [2, 128], strides = [1, 1]} : vector<16x128xf32> to vector<2x128xf32>
    %387 = arith.truncf %385 : vector<2x32xf32> to vector<2x32xbf16>
    %cst_59 = arith.constant dense<0.000000e+00> : vector<2x128xf32>
    %388 = tpu.matmul %387, %263, %cst_59 {dimension_numbers = #tpu.dot_dimension_numbers<[1], [0], [0], [1], [0, 0, 1, 1], [], []>} : vector<2x32xbf16>, vector<32x128xbf16>, vector<2x128xf32> -> vector<2x128xf32>
    %389 = arith.addf %386, %388 : vector<2x128xf32>
    %390 = vector.extract_strided_slice %389 {offsets = [0, 0], sizes = [2, 96], strides = [1, 1]} : vector<2x128xf32> to vector<2x96xf32>
    %391 = arith.negf %390 : vector<2x96xf32>
    %392 = math.exp %391 : vector<2x96xf32>
    %cst_60 = arith.constant 1.000000e+00 : f32
    %393 = vector.broadcast %cst_60 : f32 to vector<2x96xf32>
    %394 = arith.addf %393, %392 : vector<2x96xf32>
    %395 = arith.divf %393, %394 : vector<2x96xf32>
    %396 = vector.extract_strided_slice %389 {offsets = [0, 96], sizes = [2, 32], strides = [1, 1]} : vector<2x128xf32> to vector<2x32xf32>
    %397 = math.tanh %396 : vector<2x32xf32>
    %398 = vector.extract_strided_slice %395 {offsets = [0, 32], sizes = [2, 32], strides = [1, 1]} : vector<2x96xf32> to vector<2x32xf32>
    %399 = arith.mulf %398, %382 : vector<2x32xf32>
    %400 = vector.extract_strided_slice %395 {offsets = [0, 0], sizes = [2, 32], strides = [1, 1]} : vector<2x96xf32> to vector<2x32xf32>
    %401 = arith.mulf %400, %397 : vector<2x32xf32>
    %402 = arith.addf %399, %401 : vector<2x32xf32>
    %403 = vector.extract_strided_slice %395 {offsets = [0, 64], sizes = [2, 32], strides = [1, 1]} : vector<2x96xf32> to vector<2x32xf32>
    %404 = math.tanh %402 : vector<2x32xf32>
    %405 = arith.mulf %403, %404 : vector<2x32xf32>
    %406 = vector.extract_strided_slice %262 {offsets = [14, 0], sizes = [2, 128], strides = [1, 1]} : vector<16x128xf32> to vector<2x128xf32>
    %407 = arith.truncf %405 : vector<2x32xf32> to vector<2x32xbf16>
    %cst_61 = arith.constant dense<0.000000e+00> : vector<2x128xf32>
    %408 = tpu.matmul %407, %263, %cst_61 {dimension_numbers = #tpu.dot_dimension_numbers<[1], [0], [0], [1], [0, 0, 1, 1], [], []>} : vector<2x32xbf16>, vector<32x128xbf16>, vector<2x128xf32> -> vector<2x128xf32>
    %409 = arith.addf %406, %408 : vector<2x128xf32>
    %410 = vector.extract_strided_slice %409 {offsets = [0, 0], sizes = [2, 96], strides = [1, 1]} : vector<2x128xf32> to vector<2x96xf32>
    %411 = arith.negf %410 : vector<2x96xf32>
    %412 = math.exp %411 : vector<2x96xf32>
    %cst_62 = arith.constant 1.000000e+00 : f32
    %413 = vector.broadcast %cst_62 : f32 to vector<2x96xf32>
    %414 = arith.addf %413, %412 : vector<2x96xf32>
    %415 = arith.divf %413, %414 : vector<2x96xf32>
    %416 = vector.extract_strided_slice %409 {offsets = [0, 96], sizes = [2, 32], strides = [1, 1]} : vector<2x128xf32> to vector<2x32xf32>
    %417 = math.tanh %416 : vector<2x32xf32>
    %418 = vector.extract_strided_slice %415 {offsets = [0, 32], sizes = [2, 32], strides = [1, 1]} : vector<2x96xf32> to vector<2x32xf32>
    %419 = arith.mulf %418, %402 : vector<2x32xf32>
    %420 = vector.extract_strided_slice %415 {offsets = [0, 0], sizes = [2, 32], strides = [1, 1]} : vector<2x96xf32> to vector<2x32xf32>
    %421 = arith.mulf %420, %417 : vector<2x32xf32>
    %422 = arith.addf %419, %421 : vector<2x32xf32>
    %423 = vector.extract_strided_slice %415 {offsets = [0, 64], sizes = [2, 32], strides = [1, 1]} : vector<2x96xf32> to vector<2x32xf32>
    %424 = math.tanh %422 : vector<2x32xf32>
    %425 = arith.mulf %423, %424 : vector<2x32xf32>
    %c1_63 = arith.constant 1 : index
    %c0_64 = arith.constant 0 : index
    %c0_65 = arith.constant 0 : index
    %426 = vector.load %arg4[%c1_63, %c0_64, %c0_65] : memref<2x64x128xbf16, #tpu.memory_space<vmem>>, vector<1x64x128xbf16>
    %427 = vector.shape_cast %426 : vector<1x64x128xbf16> to vector<64x128xbf16>
    %428 = vector.extract_strided_slice %254 {offsets = [14, 0], sizes = [2, 64], strides = [1, 1]} : vector<16x64xf32> to vector<2x64xf32>
    %429 = arith.truncf %428 : vector<2x64xf32> to vector<2x64xbf16>
    %cst_66 = arith.constant dense<0.000000e+00> : vector<2x128xf32>
    %430 = tpu.matmul %429, %427, %cst_66 {dimension_numbers = #tpu.dot_dimension_numbers<[1], [0], [0], [1], [0, 0, 1, 1], [], []>} : vector<2x64xbf16>, vector<64x128xbf16>, vector<2x128xf32> -> vector<2x128xf32>
    %c1_67 = arith.constant 1 : index
    %c0_68 = arith.constant 0 : index
    %c0_69 = arith.constant 0 : index
    %431 = vector.load %arg6[%c1_67, %c0_68, %c0_69] : memref<2x1x128xf32, #tpu.memory_space<vmem>>, vector<1x1x128xf32>
    %432 = vector.shape_cast %431 : vector<1x1x128xf32> to vector<1x128xf32>
    %433 = vector.broadcast %432 : vector<1x128xf32> to vector<2x128xf32>
    %434 = arith.addf %430, %433 : vector<2x128xf32>
    %435 = vector.extract_strided_slice %434 {offsets = [0, 0], sizes = [2, 96], strides = [1, 1]} : vector<2x128xf32> to vector<2x96xf32>
    %436 = arith.negf %435 : vector<2x96xf32>
    %437 = math.exp %436 : vector<2x96xf32>
    %cst_70 = arith.constant 1.000000e+00 : f32
    %438 = vector.broadcast %cst_70 : f32 to vector<2x96xf32>
    %439 = arith.addf %438, %437 : vector<2x96xf32>
    %440 = arith.divf %438, %439 : vector<2x96xf32>
    %441 = vector.extract_strided_slice %434 {offsets = [0, 96], sizes = [2, 32], strides = [1, 1]} : vector<2x128xf32> to vector<2x32xf32>
    %442 = math.tanh %441 : vector<2x32xf32>
    %443 = vector.extract_strided_slice %440 {offsets = [0, 64], sizes = [2, 32], strides = [1, 1]} : vector<2x96xf32> to vector<2x32xf32>
    %444 = vector.extract_strided_slice %440 {offsets = [0, 0], sizes = [2, 32], strides = [1, 1]} : vector<2x96xf32> to vector<2x32xf32>
    %445 = arith.mulf %444, %442 : vector<2x32xf32>
    %446 = math.tanh %445 : vector<2x32xf32>
    %447 = arith.mulf %443, %446 : vector<2x32xf32>
    %448 = tpu.concatenate %425, %447 in 1 : vector<2x32xf32>, vector<2x32xf32> -> vector<2x64xf32>
    %449 = arith.truncf %448 : vector<2x64xf32> to vector<2x64xbf16>
    %c0_71 = arith.constant 0 : index
    %c0_72 = arith.constant 0 : index
    %450 = vector.load %arg7[%c0_71, %c0_72] : memref<64x128xbf16, #tpu.memory_space<vmem>>, vector<64x128xbf16>
    %cst_73 = arith.constant dense<0.000000e+00> : vector<2x128xf32>
    %451 = tpu.matmul %449, %450, %cst_73 {dimension_numbers = #tpu.dot_dimension_numbers<[1], [0], [0], [1], [0, 0, 1, 1], [], []>} : vector<2x64xbf16>, vector<64x128xbf16>, vector<2x128xf32> -> vector<2x128xf32>
    %c0_74 = arith.constant 0 : index
    %c0_75 = arith.constant 0 : index
    %452 = vector.load %arg8[%c0_74, %c0_75] : memref<1x128xf32, #tpu.memory_space<vmem>>, vector<1x128xf32>
    %453 = vector.broadcast %452 : vector<1x128xf32> to vector<2x128xf32>
    %454 = arith.addf %451, %453 : vector<2x128xf32>
    %cst_76 = arith.constant 0.000000e+00 : f32
    %455 = vector.broadcast %cst_76 : f32 to vector<2x128xf32>
    %456 = arith.maximumf %454, %455 : vector<2x128xf32>
    %c0_77 = arith.constant 0 : index
    %c0_78 = arith.constant 0 : index
    %457 = vector.load %arg9[%c0_77, %c0_78] : memref<1x128xbf16, #tpu.memory_space<vmem>>, vector<1x128xbf16>
    %458 = arith.extf %457 : vector<1x128xbf16> to vector<1x128xf32>
    %459 = vector.broadcast %458 : vector<1x128xf32> to vector<2x128xf32>
    %460 = arith.mulf %456, %459 : vector<2x128xf32>
    %cst_79 = arith.constant dense<0.000000e+00> : vector<2xf32>
    %461 = vector.multi_reduction <add>, %460, %cst_79 [1] : vector<2x128xf32> to vector<2xf32>
    %462 = vector.shape_cast %461 : vector<2xf32> to vector<2x1xf32>
    %c0_80 = arith.constant 0 : index
    %c0_81 = arith.constant 0 : index
    %463 = vector.load %arg10[%c0_80, %c0_81] : memref<1x1xf32, #tpu.memory_space<vmem>>, vector<1x1xf32>
    %464 = vector.broadcast %463 : vector<1x1xf32> to vector<2x1xf32>
    %465 = arith.addf %462, %464 : vector<2x1xf32>
    %466 = arith.negf %465 : vector<2x1xf32>
    %467 = math.exp %466 : vector<2x1xf32>
    %cst_82 = arith.constant 1.000000e+00 : f32
    %468 = vector.broadcast %cst_82 : f32 to vector<2x1xf32>
    %469 = arith.addf %468, %467 : vector<2x1xf32>
    %470 = arith.divf %468, %469 : vector<2x1xf32>
    %c0_83 = arith.constant 0 : index
    %c0_84 = arith.constant 0 : index
    %471 = vector.load %arg11[%c0_83, %c0_84] : memref<2x1xf32, #tpu.memory_space<vmem>>, vector<2x1xf32>
    tpu.vector_store %arg11[%c0_83, %c0_84], %470 {strides = array<i32>} : memref<2x1xf32, #tpu.memory_space<vmem>>, vector<2x1xf32>,
    return
  }
}

</mosaic_0001>

<llo_original>
// kernel: sentiment_lstm_forward.1
$region0: #{sentiment_lstm_forward.1}
  #allocation0 [shape = 'u32[]', space=smem, size = 0x4, offset = 0x4, fixed_abs, tag = 'smem constant byte address 0x4 - core index']
  #allocation1 [shape = 'u32[144,128]{1,0:T(1,128)}', space=vmem, size = 0x12000, scoped, tag = 'internal scratch']
  #allocation2 [shape = 'f32[1,1]{1,0:T(1,128)S(1)}', space=vmem, size = 0x200, scoped, tag = 'scoped memory for sentiment_lstm_forward.1']
  %s0 = inlined_call_operand.vmem [shape: bf16[16,16], index: 0, kind: input, shape index: {}]
  %s1 = inlined_call_operand.vmem [shape: bf16[16,256], index: 1, kind: input, shape index: {}]
  %s2 = inlined_call_operand.vmem [shape: bf16[2,32,128], index: 2, kind: input, shape index: {}]
  %s3 = inlined_call_operand.vmem [shape: f32[1,256], index: 3, kind: input, shape index: {}]
  %s4 = inlined_call_operand.vmem [shape: bf16[2,64,128], index: 4, kind: input, shape index: {}]
  %s5 = inlined_call_operand.vmem [shape: bf16[32,128], index: 5, kind: input, shape index: {}]
  %s6 = inlined_call_operand.vmem [shape: f32[2,1,128], index: 6, kind: input, shape index: {}]
  %s7 = inlined_call_operand.vmem [shape: bf16[64,128], index: 7, kind: input, shape index: {}]
  %s8 = inlined_call_operand.vmem [shape: f32[1,128], index: 8, kind: input, shape index: {}]
  %s9 = inlined_call_operand.vmem [shape: bf16[1,128], index: 9, kind: input, shape index: {}]
  %s10 = inlined_call_operand.<no memory space> [shape: f32[1,1], index: 10, kind: input, shape index: {}]
  %s11 = inlined_call_operand.vmem [shape: f32[2,1], index: 11, kind: output, shape index: {}]
  %s12 = sld [smem:[#allocation0]]
  $region54: #{sentiment_lstm_forward.1} parent=0
    _
  %s14 = ssub.s32 1, %s12
  %s15 = scalar_select 0, %s14, %s12
  %v16 = vstv %s10
  %17 = vst [vmem:[#allocation2] sm:$0x1] %v16
  // Predicated region
  $region2: #{sentiment_lstm_forward.1} parent=0 // pred_check
    _
  $region3: #{sentiment_lstm_forward.1} parent=0 // pred_check_branch
    %19 = sbr.rel (0) target = $region5
  $region4: #{sentiment_lstm_forward.1} parent=0 // pred_region
    _
  $region5: #{sentiment_lstm_forward.1} parent=0 // pred_fallthru
    _
  // Predicated region
  $region6: #{sentiment_lstm_forward.1} parent=0 // pred_check
    _
  $region7: #{sentiment_lstm_forward.1} parent=0 // pred_check_branch
    %21 = sbr.rel (0) target = $region9
  $region8: #{sentiment_lstm_forward.1} parent=0 // pred_region
    _
  $region9: #{sentiment_lstm_forward.1} parent=0 // pred_fallthru
    _
  // Predicated region
  $region10: #{sentiment_lstm_forward.1} parent=0 // pred_check
    _
  $region11: #{sentiment_lstm_forward.1} parent=0 // pred_check_branch
    %23 = sbr.rel (0) target = $region13
  $region12: #{sentiment_lstm_forward.1} parent=0 // pred_region
    _
  $region13: #{sentiment_lstm_forward.1} parent=0 // pred_fallthru
    _
  // Predicated region
  $region14: #{sentiment_lstm_forward.1} parent=0 // pred_check
    _
  $region15: #{sentiment_lstm_forward.1} parent=0 // pred_check_branch
    %25 = sbr.rel (0) target = $region17
  $region16: #{sentiment_lstm_forward.1} parent=0 // pred_region
    _
  $region17: #{sentiment_lstm_forward.1} parent=0 // pred_fallthru
    _
  // Predicated region
  $region18: #{sentiment_lstm_forward.1} parent=0 // pred_check
    _
  $region19: #{sentiment_lstm_forward.1} parent=0 // pred_check_branch
    %27 = sbr.rel (0) target = $region21
  $region20: #{sentiment_lstm_forward.1} parent=0 // pred_region
    _
  $region21: #{sentiment_lstm_forward.1} parent=0 // pred_fallthru
    _
  // Predicated region
  $region22: #{sentiment_lstm_forward.1} parent=0 // pred_check
    _
  $region23: #{sentiment_lstm_forward.1} parent=0 // pred_check_branch
    %29 = sbr.rel (0) target = $region25
  $region24: #{sentiment_lstm_forward.1} parent=0 // pred_region
    _
  $region25: #{sentiment_lstm_forward.1} parent=0 // pred_fallthru
    _
  // Predicated region
  $region26: #{sentiment_lstm_forward.1} parent=0 // pred_check
    _
  $region27: #{sentiment_lstm_forward.1} parent=0 // pred_check_branch
    %31 = sbr.rel (0) target = $region29
  $region28: #{sentiment_lstm_forward.1} parent=0 // pred_region
    _
  $region29: #{sentiment_lstm_forward.1} parent=0 // pred_fallthru
    _
  // Predicated region
  $region30: #{sentiment_lstm_forward.1} parent=0 // pred_check
    _
  $region31: #{sentiment_lstm_forward.1} parent=0 // pred_check_branch
    %33 = sbr.rel (0) target = $region33
  $region32: #{sentiment_lstm_forward.1} parent=0 // pred_region
    _
  $region33: #{sentiment_lstm_forward.1} parent=0 // pred_fallthru
    _
  // Predicated region
  $region34: #{sentiment_lstm_forward.1} parent=0 // pred_check
    _
  $region35: #{sentiment_lstm_forward.1} parent=0 // pred_check_branch
    %35 = sbr.rel (0) target = $region37
  $region36: #{sentiment_lstm_forward.1} parent=0 // pred_region
    _
  $region37: #{sentiment_lstm_forward.1} parent=0 // pred_fallthru
    _
  // Predicated region
  $region38: #{sentiment_lstm_forward.1} parent=0 // pred_check
    _
  $region39: #{sentiment_lstm_forward.1} parent=0 // pred_check_branch
    %37 = sbr.rel (0) target = $region41
  $region40: #{sentiment_lstm_forward.1} parent=0 // pred_region
    _
  $region41: #{sentiment_lstm_forward.1} parent=0 // pred_fallthru
    _
  // Predicated region
  $region42: #{sentiment_lstm_forward.1} parent=0 // pred_check
    _
  $region43: #{sentiment_lstm_forward.1} parent=0 // pred_check_branch
    %39 = sbr.rel (0) target = $region45
  $region44: #{sentiment_lstm_forward.1} parent=0 // pred_region
    _
  $region45: #{sentiment_lstm_forward.1} parent=0 // pred_fallthru
    _
  %v41 = vld [vmem:[%s0] sm:$0xf]
  %v42 = vld [vmem:[%s0 + $0x4] sm:$0xf]
  %v43 = vld [vmem:[%s1] sm:$0xff]
  %v44 = vld [vmem:[%s1 + $0x8] sm:$0xff]
  %v45 = vld [vmem:[%s3] sm:$0x3]
  %v47 = vlaneseq
  %v48 = vshrl.u32 %v47, 7
  %v49 = vsub.s32 0, %v48
  %v50 = vrot.slane %v45, %v49
  %v51 = vlaneseq
  %v52 = vshrl.u32 %v51, 7
  %v53 = vsub.s32 1, %v52
  %v54 = vrot.slane %v45, %v53
  %v59 = vunpack.c.l.b16 %v41
  %v60 = vunpack.c.l.b16 %v42
  %v61 = vpack.c.b16 %v60, %v59
  %v64 = vunpack.c.l.b16 %v43
  %v65 = vunpack.c.h.b16 %v43
  %v66 = vunpack.c.l.b16 %v44
  %v67 = vunpack.c.h.b16 %v44
  %v68 = vpack.c.b16 %v66, %v64
  %v69 = vpack.c.b16 %v67, %v65
  %vm72 = vcmask 130048
  %v74 = vsel %vm72, %v61, 0
  %76 = vmatprep.subr.bf16.mxu0 %v69
  %77 = vmatpush1.bf16.msra.mxu0 %v68
  %78 = vmatprep.subr.bf16.mxu0 0
  %79 = vmatpush1.bf16.msra.mxu0 0
  %80 = vmatprep.subr.bf16.mxu0 0
  %81 = vmatpush1.bf16.msra.mxu0 0
  %82 = vmatprep.subr.bf16.mxu0 0
  %83 = vmatpush1.bf16.msra.mxu0 0
  %84 = vmatprep.subr.bf16.mxu0 0
  %85 = vmatpush1.bf16.msra.mxu0 0
  %86 = vmatprep.subr.bf16.mxu0 0
  %87 = vmatpush1.bf16.msra.mxu0 0
  %88 = vmatprep.subr.bf16.mxu0 0
  %89 = vmatpush1.bf16.msra.mxu0 0
  %90 = vmatprep.subr.bf16.mxu0 0
  %91 = vmatpush1.bf16.msra.mxu0 0
  %92 = vmatprep.subr.bf16.mxu0 0
  %93 = vmatpush1.bf16.msra.mxu0 0
  %94 = vmatprep.subr.bf16.mxu0 0
  %95 = vmatpush1.bf16.msra.mxu0 0
  %96 = vmatprep.subr.bf16.mxu0 0
  %97 = vmatpush1.bf16.msra.mxu0 0
  %98 = vmatprep.subr.bf16.mxu0 0
  %99 = vmatpush1.bf16.msra.mxu0 0
  %100 = vmatprep.subr.bf16.mxu0 0
  %101 = vmatpush1.bf16.msra.mxu0 0
  %102 = vmatprep.subr.bf16.mxu0 0
  %103 = vmatpush1.bf16.msra.mxu0 0
  %104 = vmatprep.subr.bf16.mxu0 0
  %105 = vmatpush1.bf16.msra.mxu0 0
  %106 = vmatprep.subr.bf16.mxu0 0
  %107 = vmatpush1.bf16.msra.mxu0 0
  %108 = vmatprep.mubr.bf16.mxu0 0
  %109 = vmatmul.mubr.bf16.gmra.mrb[0].mxu0 %v74
  %v110 = vpop.f32.mrb[0].mxu0
  %v111 = vadd.f32 %v50, %v110
  %v112 = vpop.f32.mrb[0].mxu0
  %v113 = vadd.f32 %v54, %v112
  %v114 = vpop.f32.mrb[0].mxu0
  %v115 = vadd.f32 %v50, %v114
  %v116 = vpop.f32.mrb[0].mxu0
  %v117 = vadd.f32 %v54, %v116
  %118 = vdwg.mxu0
  %v119 = vld [vmem:[%s2] sm:$0xf]
  %v120 = vld [vmem:[%s2 + $0x4] sm:$0xf]
  %v121 = vld [vmem:[%s2 + $0x8] sm:$0xf]
  %v122 = vld [vmem:[%s2 + $0xc] sm:$0xf]
  %s123 = scalar_lea.vmem %s2, 16
  %v124 = vld [vmem:[%s123] sm:$0xf]
  %v125 = vld [vmem:[%s123 + $0x4] sm:$0xf]
  %v126 = vld [vmem:[%s123 + $0x8] sm:$0xf]
  %v127 = vld [vmem:[%s123 + $0xc] sm:$0xf]
  %v132 = vunpack.c.l.b16 %v119
  %v133 = vunpack.c.l.b16 %v120
  %v134 = vunpack.c.l.b16 %v121
  %v135 = vunpack.c.l.b16 %v122
  %v136 = vpack.c.b16 %v133, %v132
  %v137 = vpack.c.b16 %v135, %v134
  %vm140 = vcmask 261120
  %v142 = vsel %vm140, 0, 0
  %144 = vmatprep.subr.bf16.mxu0 0
  %145 = vmatpush1.bf16.msra.mxu0 %v136
  %146 = vmatprep.subr.bf16.mxu0 0
  %147 = vmatpush1.bf16.msra.mxu0 %v137
  %148 = vmatprep.subr.bf16.mxu0 0
  %149 = vmatpush1.bf16.msra.mxu0 0
  %150 = vmatprep.subr.bf16.mxu0 0
  %151 = vmatpush1.bf16.msra.mxu0 0
  %152 = vmatprep.subr.bf16.mxu0 0
  %153 = vmatpush1.bf16.msra.mxu0 0
  %154 = vmatprep.subr.bf16.mxu0 0
  %155 = vmatpush1.bf16.msra.mxu0 0
  %156 = vmatprep.subr.bf16.mxu0 0
  %157 = vmatpush1.bf16.msra.mxu0 0
  %158 = vmatprep.subr.bf16.mxu0 0
  %159 = vmatpush1.bf16.msra.mxu0 0
  %160 = vmatprep.subr.bf16.mxu0 0
  %161 = vmatpush1.bf16.msra.mxu0 0
  %162 = vmatprep.subr.bf16.mxu0 0
  %163 = vmatpush1.bf16.msra.mxu0 0
  %164 = vmatprep.subr.bf16.mxu0 0
  %165 = vmatpush1.bf16.msra.mxu0 0
  %166 = vmatprep.subr.bf16.mxu0 0
  %167 = vmatpush1.bf16.msra.mxu0 0
  %168 = vmatprep.subr.bf16.mxu0 0
  %169 = vmatpush1.bf16.msra.mxu0 0
  %170 = vmatprep.subr.bf16.mxu0 0
  %171 = vmatpush1.bf16.msra.mxu0 0
  %172 = vmatprep.subr.bf16.mxu0 0
  %173 = vmatpush1.bf16.msra.mxu0 0
  %174 = vmatprep.subr.bf16.mxu0 0
  %175 = vmatpush1.bf16.msra.mxu0 0
  %176 = vmatprep.mubr.bf16.mxu0 0
  %177 = vmatmul.mubr.bf16.gmra.mrb[0].mxu0 %v142
  %v178 = vpop.f32.mrb[0].mxu0
  %v179 = vadd.f32 0.0, %v178
  %v180 = vpop.f32.mrb[0].mxu0
  %v181 = vpop.f32.mrb[0].mxu0
  %v182 = vpop.f32.mrb[0].mxu0
  %183 = vdwg.mxu0
  %v184 = vadd.f32 %v111, %v179
  %v189 = vunpack.c.l.b16 %v124
  %v190 = vunpack.c.l.b16 %v125
  %v191 = vunpack.c.l.b16 %v126
  %v192 = vunpack.c.l.b16 %v127
  %v193 = vpack.c.b16 %v190, %v189
  %v194 = vpack.c.b16 %v192, %v191
  %197 = vmatprep.subr.bf16.mxu0 0
  %198 = vmatpush1.bf16.msra.mxu0 %v193
  %199 = vmatprep.subr.bf16.mxu0 0
  %200 = vmatpush1.bf16.msra.mxu0 %v194
  %201 = vmatprep.subr.bf16.mxu0 0
  %202 = vmatpush1.bf16.msra.mxu0 0
  %203 = vmatprep.subr.bf16.mxu0 0
  %204 = vmatpush1.bf16.msra.mxu0 0
  %205 = vmatprep.subr.bf16.mxu0 0
  %206 = vmatpush1.bf16.msra.mxu0 0
  %207 = vmatprep.subr.bf16.mxu0 0
  %208 = vmatpush1.bf16.msra.mxu0 0
  %209 = vmatprep.subr.bf16.mxu0 0
  %210 = vmatpush1.bf16.msra.mxu0 0
  %211 = vmatprep.subr.bf16.mxu0 0
  %212 = vmatpush1.bf16.msra.mxu0 0
  %213 = vmatprep.subr.bf16.mxu0 0
  %214 = vmatpush1.bf16.msra.mxu0 0
  %215 = vmatprep.subr.bf16.mxu0 0
  %216 = vmatpush1.bf16.msra.mxu0 0
  %217 = vmatprep.subr.bf16.mxu0 0
  %218 = vmatpush1.bf16.msra.mxu0 0
  %219 = vmatprep.subr.bf16.mxu0 0
  %220 = vmatpush1.bf16.msra.mxu0 0
  %221 = vmatprep.subr.bf16.mxu0 0
  %222 = vmatpush1.bf16.msra.mxu0 0
  %223 = vmatprep.subr.bf16.mxu0 0
  %224 = vmatpush1.bf16.msra.mxu0 0
  %225 = vmatprep.subr.bf16.mxu0 0
  %226 = vmatpush1.bf16.msra.mxu0 0
  %227 = vmatprep.subr.bf16.mxu0 0
  %228 = vmatpush1.bf16.msra.mxu0 0
  %229 = vmatprep.mubr.bf16.mxu0 0
  %230 = vmatmul.mubr.bf16.gmra.mrb[0].mxu0 %v142
  %v231 = vpop.f32.mrb[0].mxu0
  %v232 = vadd.f32 0.0, %v231
  %v233 = vpop.f32.mrb[0].mxu0
  %v234 = vpop.f32.mrb[0].mxu0
  %v235 = vpop.f32.mrb[0].mxu0
  %236 = vdwg.mxu0
  %v238 = vrot.slane %v232, 2
  %v240 = vadd.f32 %v117, %v238
  %v242 = vrot.slane %v240, 4
  %vm244 = vcmask 1041408
  %v245 = vsel %vm244, %v184, %v242
  %v246 = vxor.u32 %v245, 2147483648
  %v247 = vmul.f32 %v246, 1.442695
  %v248 = vpow.pop %v247
  %v249 = vadd.f32 %v248, 1.0
  %v250 = vrcp.pop %v249
  %v251 = vmul.f32 1.0, %v250
  %v252 = vtanh.pop %v245
  %v253 = vmul.f32 %v251, 0.0
  %255 = vrot.lane.b32.xlu0 %v252, 32
  %v256 = vpop.permute.xlu0 %255
  %v258 = vmul.f32 %v251, %v256
  %260 = vrot.lane.b32.xlu0 %v258, 32
  %v261 = vpop.permute.xlu0 %260
  %v263 = vadd.f32 %v253, %v261
  %v264 = vtanh.pop %v263
  %266 = vrot.lane.b32.xlu0 %v264, 32
  %v267 = vpop.permute.xlu0 %266
  %v269 = vmul.f32 %v251, %v267
  %v270 = vpack.c.bf16 %v269, %v269
  %272 = vrot.lane.b32.xlu0 %v270, 64
  %v273 = vpop.permute.xlu0 %272
  %v275 = vsel %vm140, %v273, 0
  %277 = vmatprep.subr.bf16.mxu0 0
  %278 = vmatpush1.bf16.msra.mxu0 %v136
  %279 = vmatprep.subr.bf16.mxu0 0
  %280 = vmatpush1.bf16.msra.mxu0 %v137
  %281 = vmatprep.subr.bf16.mxu0 0
  %282 = vmatpush1.bf16.msra.mxu0 0
  %283 = vmatprep.subr.bf16.mxu0 0
  %284 = vmatpush1.bf16.msra.mxu0 0
  %285 = vmatprep.subr.bf16.mxu0 0
  %286 = vmatpush1.bf16.msra.mxu0 0
  %287 = vmatprep.subr.bf16.mxu0 0
  %288 = vmatpush1.bf16.msra.mxu0 0
  %289 = vmatprep.subr.bf16.mxu0 0
  %290 = vmatpush1.bf16.msra.mxu0 0
  %291 = vmatprep.subr.bf16.mxu0 0
  %292 = vmatpush1.bf16.msra.mxu0 0
  %293 = vmatprep.subr.bf16.mxu0 0
  %294 = vmatpush1.bf16.msra.mxu0 0
  %295 = vmatprep.subr.bf16.mxu0 0
  %296 = vmatpush1.bf16.msra.mxu0 0
  %297 = vmatprep.subr.bf16.mxu0 0
  %298 = vmatpush1.bf16.msra.mxu0 0
  %299 = vmatprep.subr.bf16.mxu0 0
  %300 = vmatpush1.bf16.msra.mxu0 0
  %301 = vmatprep.subr.bf16.mxu0 0
  %302 = vmatpush1.bf16.msra.mxu0 0
  %303 = vmatprep.subr.bf16.mxu0 0
  %304 = vmatpush1.bf16.msra.mxu0 0
  %305 = vmatprep.subr.bf16.mxu0 0
  %306 = vmatpush1.bf16.msra.mxu0 0
  %307 = vmatprep.subr.bf16.mxu0 0
  %308 = vmatpush1.bf16.msra.mxu0 0
  %309 = vmatprep.mubr.bf16.mxu0 0
  %310 = vmatmul.mubr.bf16.gmra.mrb[0].mxu0 %v275
  %v311 = vpop.f32.mrb[0].mxu0
  %v312 = vadd.f32 0.0, %v311
  %v313 = vpop.f32.mrb[0].mxu0
  %v314 = vpop.f32.mrb[0].mxu0
  %v315 = vpop.f32.mrb[0].mxu0
  %316 = vdwg.mxu0
  %v318 = vrot.slane %v312, 6
  %v320 = vadd.f32 %v111, %v318
  %v321 = vrot.slane %v270, 1
  %322 = vrot.lane.b32.xlu0 %v321, 64
  %v323 = vpop.permute.xlu0 %322
  %v325 = vsel %vm140, %v323, 0
  %327 = vmatprep.subr.bf16.mxu0 0
  %328 = vmatpush1.bf16.msra.mxu0 %v193
  %329 = vmatprep.subr.bf16.mxu0 0
  %330 = vmatpush1.bf16.msra.mxu0 %v194
  %331 = vmatprep.subr.bf16.mxu0 0
  %332 = vmatpush1.bf16.msra.mxu0 0
  %333 = vmatprep.subr.bf16.mxu0 0
  %334 = vmatpush1.bf16.msra.mxu0 0
  %335 = vmatprep.subr.bf16.mxu0 0
  %336 = vmatpush1.bf16.msra.mxu0 0
  %337 = vmatprep.subr.bf16.mxu0 0
  %338 = vmatpush1.bf16.msra.mxu0 0
  %339 = vmatprep.subr.bf16.mxu0 0
  %340 = vmatpush1.bf16.msra.mxu0 0
  %341 = vmatprep.subr.bf16.mxu0 0
  %342 = vmatpush1.bf16.msra.mxu0 0
  %343 = vmatprep.subr.bf16.mxu0 0
  %344 = vmatpush1.bf16.msra.mxu0 0
  %345 = vmatprep.subr.bf16.mxu0 0
  %346 = vmatpush1.bf16.msra.mxu0 0
  %347 = vmatprep.subr.bf16.mxu0 0
  %348 = vmatpush1.bf16.msra.mxu0 0
  %349 = vmatprep.subr.bf16.mxu0 0
  %350 = vmatpush1.bf16.msra.mxu0 0
  %351 = vmatprep.subr.bf16.mxu0 0
  %352 = vmatpush1.bf16.msra.mxu0 0
  %353 = vmatprep.subr.bf16.mxu0 0
  %354 = vmatpush1.bf16.msra.mxu0 0
  %355 = vmatprep.subr.bf16.mxu0 0
  %356 = vmatpush1.bf16.msra.mxu0 0
  %357 = vmatprep.subr.bf16.mxu0 0
  %358 = vmatpush1.bf16.msra.mxu0 0
  %359 = vmatprep.mubr.bf16.mxu0 0
  %360 = vmatmul.mubr.bf16.gmra.mrb[0].mxu0 %v325
  %v361 = vpop.f32.mrb[0].mxu0
  %v362 = vadd.f32 0.0, %v361
  %v363 = vpop.f32.mrb[0].mxu0
  %v364 = vpop.f32.mrb[0].mxu0
  %v365 = vpop.f32.mrb[0].mxu0
  %366 = vdwg.mxu0
  %v368 = vrot.slane %v362, 4
  %v370 = vadd.f32 %v117, %v368
  %v372 = vrot.slane %v320, 2
  %v375 = vrot.slane %v370, 2
  %v377 = vsel %vm244, %v372, %v375
  %v378 = vxor.u32 %v377, 2147483648
  %v379 = vmul.f32 %v378, 1.442695
  %v380 = vpow.pop %v379
  %v381 = vadd.f32 %v380, 1.0
  %v382 = vrcp.pop %v381
  %v383 = vmul.f32 1.0, %v382
  %v384 = vtanh.pop %v377
  %v385 = vmul.f32 %v383, %v263
  %387 = vrot.lane.b32.xlu0 %v384, 32
  %v388 = vpop.permute.xlu0 %387
  %v390 = vmul.f32 %v383, %v388
  %392 = vrot.lane.b32.xlu0 %v390, 32
  %v393 = vpop.permute.xlu0 %392
  %v395 = vadd.f32 %v385, %v393
  %v396 = vtanh.pop %v395
  %398 = vrot.lane.b32.xlu0 %v396, 32
  %v399 = vpop.permute.xlu0 %398
  %v401 = vmul.f32 %v383, %v399
  %v402 = vpack.c.bf16 %v401, %v401
  %404 = vrot.lane.b32.xlu0 %v402, 64
  %v405 = vpop.permute.xlu0 %404
  %v407 = vsel %vm140, %v405, 0
  %409 = vmatprep.subr.bf16.mxu0 0
  %410 = vmatpush1.bf16.msra.mxu0 %v136
  %411 = vmatprep.subr.bf16.mxu0 0
  %412 = vmatpush1.bf16.msra.mxu0 %v137
  %413 = vmatprep.subr.bf16.mxu0 0
  %414 = vmatpush1.bf16.msra.mxu0 0
  %415 = vmatprep.subr.bf16.mxu0 0
  %416 = vmatpush1.bf16.msra.mxu0 0
  %417 = vmatprep.subr.bf16.mxu0 0
  %418 = vmatpush1.bf16.msra.mxu0 0
  %419 = vmatprep.subr.bf16.mxu0 0
  %420 = vmatpush1.bf16.msra.mxu0 0
  %421 = vmatprep.subr.bf16.mxu0 0
  %422 = vmatpush1.bf16.msra.mxu0 0
  %423 = vmatprep.subr.bf16.mxu0 0
  %424 = vmatpush1.bf16.msra.mxu0 0
  %425 = vmatprep.subr.bf16.mxu0 0
  %426 = vmatpush1.bf16.msra.mxu0 0
  %427 = vmatprep.subr.bf16.mxu0 0
  %428 = vmatpush1.bf16.msra.mxu0 0
  %429 = vmatprep.subr.bf16.mxu0 0
  %430 = vmatpush1.bf16.msra.mxu0 0
  %431 = vmatprep.subr.bf16.mxu0 0
  %432 = vmatpush1.bf16.msra.mxu0 0
  %433 = vmatprep.subr.bf16.mxu0 0
  %434 = vmatpush1.bf16.msra.mxu0 0
  %435 = vmatprep.subr.bf16.mxu0 0
  %436 = vmatpush1.bf16.msra.mxu0 0
  %437 = vmatprep.subr.bf16.mxu0 0
  %438 = vmatpush1.bf16.msra.mxu0 0
  %439 = vmatprep.subr.bf16.mxu0 0
  %440 = vmatpush1.bf16.msra.mxu0 0
  %441 = vmatprep.mubr.bf16.mxu0 0
  %442 = vmatmul.mubr.bf16.gmra.mrb[0].mxu0 %v407
  %v443 = vpop.f32.mrb[0].mxu0
  %v444 = vadd.f32 0.0, %v443
  %v445 = vpop.f32.mrb[0].mxu0
  %v446 = vpop.f32.mrb[0].mxu0
  %v447 = vpop.f32.mrb[0].mxu0
  %448 = vdwg.mxu0
  %v450 = vrot.slane %v444, 4
  %v452 = vadd.f32 %v111, %v450
  %v453 = vrot.slane %v402, 1
  %454 = vrot.lane.b32.xlu0 %v453, 64
  %v455 = vpop.permute.xlu0 %454
  %v457 = vsel %vm140, %v455, 0
  %459 = vmatprep.subr.bf16.mxu0 0
  %460 = vmatpush1.bf16.msra.mxu0 %v193
  %461 = vmatprep.subr.bf16.mxu0 0
  %462 = vmatpush1.bf16.msra.mxu0 %v194
  %463 = vmatprep.subr.bf16.mxu0 0
  %464 = vmatpush1.bf16.msra.mxu0 0
  %465 = vmatprep.subr.bf16.mxu0 0
  %466 = vmatpush1.bf16.msra.mxu0 0
  %467 = vmatprep.subr.bf16.mxu0 0
  %468 = vmatpush1.bf16.msra.mxu0 0
  %469 = vmatprep.subr.bf16.mxu0 0
  %470 = vmatpush1.bf16.msra.mxu0 0
  %471 = vmatprep.subr.bf16.mxu0 0
  %472 = vmatpush1.bf16.msra.mxu0 0
  %473 = vmatprep.subr.bf16.mxu0 0
  %474 = vmatpush1.bf16.msra.mxu0 0
  %475 = vmatprep.subr.bf16.mxu0 0
  %476 = vmatpush1.bf16.msra.mxu0 0
  %477 = vmatprep.subr.bf16.mxu0 0
  %478 = vmatpush1.bf16.msra.mxu0 0
  %479 = vmatprep.subr.bf16.mxu0 0
  %480 = vmatpush1.bf16.msra.mxu0 0
  %481 = vmatprep.subr.bf16.mxu0 0
  %482 = vmatpush1.bf16.msra.mxu0 0
  %483 = vmatprep.subr.bf16.mxu0 0
  %484 = vmatpush1.bf16.msra.mxu0 0
  %485 = vmatprep.subr.bf16.mxu0 0
  %486 = vmatpush1.bf16.msra.mxu0 0
  %487 = vmatprep.subr.bf16.mxu0 0
  %488 = vmatpush1.bf16.msra.mxu0 0
  %489 = vmatprep.subr.bf16.mxu0 0
  %490 = vmatpush1.bf16.msra.mxu0 0
  %491 = vmatprep.mubr.bf16.mxu0 0
  %492 = vmatmul.mubr.bf16.gmra.mrb[0].mxu0 %v457
  %v493 = vpop.f32.mrb[0].mxu0
  %v494 = vadd.f32 0.0, %v493
  %v495 = vpop.f32.mrb[0].mxu0
  %v496 = vpop.f32.mrb[0].mxu0
  %v497 = vpop.f32.mrb[0].mxu0
  %498 = vdwg.mxu0
  %v500 = vrot.slane %v494, 6
  %v502 = vadd.f32 %v117, %v500
  %v504 = vrot.slane %v452, 4
  %v506 = vsel %vm244, %v504, %v502
  %v507 = vxor.u32 %v506, 2147483648
  %v508 = vmul.f32 %v507, 1.442695
  %v509 = vpow.pop %v508
  %v510 = vadd.f32 %v509, 1.0
  %v511 = vrcp.pop %v510
  %v512 = vmul.f32 1.0, %v511
  %v513 = vtanh.pop %v506
  %v514 = vmul.f32 %v512, %v395
  %516 = vrot.lane.b32.xlu0 %v513, 32
  %v517 = vpop.permute.xlu0 %516
  %v519 = vmul.f32 %v512, %v517
  %521 = vrot.lane.b32.xlu0 %v519, 32
  %v522 = vpop.permute.xlu0 %521
  %v524 = vadd.f32 %v514, %v522
  %v525 = vtanh.pop %v524
  %527 = vrot.lane.b32.xlu0 %v525, 32
  %v528 = vpop.permute.xlu0 %527
  %v530 = vmul.f32 %v512, %v528
  %v531 = vpack.c.bf16 %v530, %v530
  %533 = vrot.lane.b32.xlu0 %v531, 64
  %v534 = vpop.permute.xlu0 %533
  %v536 = vsel %vm140, %v534, 0
  %538 = vmatprep.subr.bf16.mxu0 0
  %539 = vmatpush1.bf16.msra.mxu0 %v136
  %540 = vmatprep.subr.bf16.mxu0 0
  %541 = vmatpush1.bf16.msra.mxu0 %v137
  %542 = vmatprep.subr.bf16.mxu0 0
  %543 = vmatpush1.bf16.msra.mxu0 0
  %544 = vmatprep.subr.bf16.mxu0 0
  %545 = vmatpush1.bf16.msra.mxu0 0
  %546 = vmatprep.subr.bf16.mxu0 0
  %547 = vmatpush1.bf16.msra.mxu0 0
  %548 = vmatprep.subr.bf16.mxu0 0
  %549 = vmatpush1.bf16.msra.mxu0 0
  %550 = vmatprep.subr.bf16.mxu0 0
  %551 = vmatpush1.bf16.msra.mxu0 0
  %552 = vmatprep.subr.bf16.mxu0 0
  %553 = vmatpush1.bf16.msra.mxu0 0
  %554 = vmatprep.subr.bf16.mxu0 0
  %555 = vmatpush1.bf16.msra.mxu0 0
  %556 = vmatprep.subr.bf16.mxu0 0
  %557 = vmatpush1.bf16.msra.mxu0 0
  %558 = vmatprep.subr.bf16.mxu0 0
  %559 = vmatpush1.bf16.msra.mxu0 0
  %560 = vmatprep.subr.bf16.mxu0 0
  %561 = vmatpush1.bf16.msra.mxu0 0
  %562 = vmatprep.subr.bf16.mxu0 0
  %563 = vmatpush1.bf16.msra.mxu0 0
  %564 = vmatprep.subr.bf16.mxu0 0
  %565 = vmatpush1.bf16.msra.mxu0 0
  %566 = vmatprep.subr.bf16.mxu0 0
  %567 = vmatpush1.bf16.msra.mxu0 0
  %568 = vmatprep.subr.bf16.mxu0 0
  %569 = vmatpush1.bf16.msra.mxu0 0
  %570 = vmatprep.mubr.bf16.mxu0 0
  %571 = vmatmul.mubr.bf16.gmra.mrb[0].mxu0 %v536
  %v572 = vpop.f32.mrb[0].mxu0
  %v573 = vadd.f32 0.0, %v572
  %v574 = vpop.f32.mrb[0].mxu0
  %v575 = vpop.f32.mrb[0].mxu0
  %v576 = vpop.f32.mrb[0].mxu0
  %577 = vdwg.mxu0
  %v579 = vrot.slane %v573, 2
  %v581 = vadd.f32 %v111, %v579
  %v582 = vrot.slane %v531, 1
  %583 = vrot.lane.b32.xlu0 %v582, 64
  %v584 = vpop.permute.xlu0 %583
  %v586 = vsel %vm140, %v584, 0
  %588 = vmatprep.subr.bf16.mxu0 0
  %589 = vmatpush1.bf16.msra.mxu0 %v193
  %590 = vmatprep.subr.bf16.mxu0 0
  %591 = vmatpush1.bf16.msra.mxu0 %v194
  %592 = vmatprep.subr.bf16.mxu0 0
  %593 = vmatpush1.bf16.msra.mxu0 0
  %594 = vmatprep.subr.bf16.mxu0 0
  %595 = vmatpush1.bf16.msra.mxu0 0
  %596 = vmatprep.subr.bf16.mxu0 0
  %597 = vmatpush1.bf16.msra.mxu0 0
  %598 = vmatprep.subr.bf16.mxu0 0
  %599 = vmatpush1.bf16.msra.mxu0 0
  %600 = vmatprep.subr.bf16.mxu0 0
  %601 = vmatpush1.bf16.msra.mxu0 0
  %602 = vmatprep.subr.bf16.mxu0 0
  %603 = vmatpush1.bf16.msra.mxu0 0
  %604 = vmatprep.subr.bf16.mxu0 0
  %605 = vmatpush1.bf16.msra.mxu0 0
  %606 = vmatprep.subr.bf16.mxu0 0
  %607 = vmatpush1.bf16.msra.mxu0 0
  %608 = vmatprep.subr.bf16.mxu0 0
  %609 = vmatpush1.bf16.msra.mxu0 0
  %610 = vmatprep.subr.bf16.mxu0 0
  %611 = vmatpush1.bf16.msra.mxu0 0
  %612 = vmatprep.subr.bf16.mxu0 0
  %613 = vmatpush1.bf16.msra.mxu0 0
  %614 = vmatprep.subr.bf16.mxu0 0
  %615 = vmatpush1.bf16.msra.mxu0 0
  %616 = vmatprep.subr.bf16.mxu0 0
  %617 = vmatpush1.bf16.msra.mxu0 0
  %618 = vmatprep.subr.bf16.mxu0 0
  %619 = vmatpush1.bf16.msra.mxu0 0
  %620 = vmatprep.mubr.bf16.mxu0 0
  %621 = vmatmul.mubr.bf16.gmra.mrb[0].mxu0 %v586
  %v622 = vpop.f32.mrb[0].mxu0
  %v623 = vadd.f32 0.0, %v622
  %v624 = vpop.f32.mrb[0].mxu0
  %v625 = vpop.f32.mrb[0].mxu0
  %v626 = vpop.f32.mrb[0].mxu0
  %627 = vdwg.mxu0
  %v628 = vadd.f32 %v117, %v623
  %v630 = vrot.slane %v581, 6
  %v633 = vrot.slane %v628, 6
  %v635 = vsel %vm244, %v630, %v633
  %v636 = vxor.u32 %v635, 2147483648
  %v637 = vmul.f32 %v636, 1.442695
  %v638 = vpow.pop %v637
  %v639 = vadd.f32 %v638, 1.0
  %v640 = vrcp.pop %v639
  %v641 = vmul.f32 1.0, %v640
  %v642 = vtanh.pop %v635
  %v643 = vmul.f32 %v641, %v524
  %645 = vrot.lane.b32.xlu0 %v642, 32
  %v646 = vpop.permute.xlu0 %645
  %v648 = vmul.f32 %v641, %v646
  %650 = vrot.lane.b32.xlu0 %v648, 32
  %v651 = vpop.permute.xlu0 %650
  %v653 = vadd.f32 %v643, %v651
  %v654 = vtanh.pop %v653
  %656 = vrot.lane.b32.xlu0 %v654, 32
  %v657 = vpop.permute.xlu0 %656
  %v659 = vmul.f32 %v641, %v657
  %v660 = vpack.c.bf16 %v659, %v659
  %662 = vrot.lane.b32.xlu0 %v660, 64
  %v663 = vpop.permute.xlu0 %662
  %v665 = vsel %vm140, %v663, 0
  %667 = vmatprep.subr.bf16.mxu0 0
  %668 = vmatpush1.bf16.msra.mxu0 %v136
  %669 = vmatprep.subr.bf16.mxu0 0
  %670 = vmatpush1.bf16.msra.mxu0 %v137
  %671 = vmatprep.subr.bf16.mxu0 0
  %672 = vmatpush1.bf16.msra.mxu0 0
  %673 = vmatprep.subr.bf16.mxu0 0
  %674 = vmatpush1.bf16.msra.mxu0 0
  %675 = vmatprep.subr.bf16.mxu0 0
  %676 = vmatpush1.bf16.msra.mxu0 0
  %677 = vmatprep.subr.bf16.mxu0 0
  %678 = vmatpush1.bf16.msra.mxu0 0
  %679 = vmatprep.subr.bf16.mxu0 0
  %680 = vmatpush1.bf16.msra.mxu0 0
  %681 = vmatprep.subr.bf16.mxu0 0
  %682 = vmatpush1.bf16.msra.mxu0 0
  %683 = vmatprep.subr.bf16.mxu0 0
  %684 = vmatpush1.bf16.msra.mxu0 0
  %685 = vmatprep.subr.bf16.mxu0 0
  %686 = vmatpush1.bf16.msra.mxu0 0
  %687 = vmatprep.subr.bf16.mxu0 0
  %688 = vmatpush1.bf16.msra.mxu0 0
  %689 = vmatprep.subr.bf16.mxu0 0
  %690 = vmatpush1.bf16.msra.mxu0 0
  %691 = vmatprep.subr.bf16.mxu0 0
  %692 = vmatpush1.bf16.msra.mxu0 0
  %693 = vmatprep.subr.bf16.mxu0 0
  %694 = vmatpush1.bf16.msra.mxu0 0
  %695 = vmatprep.subr.bf16.mxu0 0
  %696 = vmatpush1.bf16.msra.mxu0 0
  %697 = vmatprep.subr.bf16.mxu0 0
  %698 = vmatpush1.bf16.msra.mxu0 0
  %699 = vmatprep.mubr.bf16.mxu0 0
  %700 = vmatmul.mubr.bf16.gmra.mrb[0].mxu0 %v665
  %v701 = vpop.f32.mrb[0].mxu0
  %v702 = vadd.f32 0.0, %v701
  %v703 = vpop.f32.mrb[0].mxu0
  %v704 = vpop.f32.mrb[0].mxu0
  %v705 = vpop.f32.mrb[0].mxu0
  %706 = vdwg.mxu0
  %v707 = vadd.f32 %v115, %v702
  %v708 = vrot.slane %v660, 1
  %709 = vrot.lane.b32.xlu0 %v708, 64
  %v710 = vpop.permute.xlu0 %709
  %v712 = vsel %vm140, %v710, 0
  %714 = vmatprep.subr.bf16.mxu0 0
  %715 = vmatpush1.bf16.msra.mxu0 %v193
  %716 = vmatprep.subr.bf16.mxu0 0
  %717 = vmatpush1.bf16.msra.mxu0 %v194
  %718 = vmatprep.subr.bf16.mxu0 0
  %719 = vmatpush1.bf16.msra.mxu0 0
  %720 = vmatprep.subr.bf16.mxu0 0
  %721 = vmatpush1.bf16.msra.mxu0 0
  %722 = vmatprep.subr.bf16.mxu0 0
  %723 = vmatpush1.bf16.msra.mxu0 0
  %724 = vmatprep.subr.bf16.mxu0 0
  %725 = vmatpush1.bf16.msra.mxu0 0
  %726 = vmatprep.subr.bf16.mxu0 0
  %727 = vmatpush1.bf16.msra.mxu0 0
  %728 = vmatprep.subr.bf16.mxu0 0
  %729 = vmatpush1.bf16.msra.mxu0 0
  %730 = vmatprep.subr.bf16.mxu0 0
  %731 = vmatpush1.bf16.msra.mxu0 0
  %732 = vmatprep.subr.bf16.mxu0 0
  %733 = vmatpush1.bf16.msra.mxu0 0
  %734 = vmatprep.subr.bf16.mxu0 0
  %735 = vmatpush1.bf16.msra.mxu0 0
  %736 = vmatprep.subr.bf16.mxu0 0
  %737 = vmatpush1.bf16.msra.mxu0 0
  %738 = vmatprep.subr.bf16.mxu0 0
  %739 = vmatpush1.bf16.msra.mxu0 0
  %740 = vmatprep.subr.bf16.mxu0 0
  %741 = vmatpush1.bf16.msra.mxu0 0
  %742 = vmatprep.subr.bf16.mxu0 0
  %743 = vmatpush1.bf16.msra.mxu0 0
  %744 = vmatprep.subr.bf16.mxu0 0
  %745 = vmatpush1.bf16.msra.mxu0 0
  %746 = vmatprep.mubr.bf16.mxu0 0
  %747 = vmatmul.mubr.bf16.gmra.mrb[0].mxu0 %v712
  %v748 = vpop.f32.mrb[0].mxu0
  %v749 = vadd.f32 0.0, %v748
  %v750 = vpop.f32.mrb[0].mxu0
  %v751 = vpop.f32.mrb[0].mxu0
  %v752 = vpop.f32.mrb[0].mxu0
  %753 = vdwg.mxu0
  %v755 = vrot.slane %v749, 2
  %v757 = vadd.f32 %v113, %v755
  %v759 = vrot.slane %v757, 4
  %v761 = vsel %vm244, %v707, %v759
  %v762 = vxor.u32 %v761, 2147483648
  %v763 = vmul.f32 %v762, 1.442695
  %v764 = vpow.pop %v763
  %v765 = vadd.f32 %v764, 1.0
  %v766 = vrcp.pop %v765
  %v767 = vmul.f32 1.0, %v766
  %v768 = vtanh.pop %v761
  %v769 = vmul.f32 %v767, %v653
  %771 = vrot.lane.b32.xlu0 %v768, 32
  %v772 = vpop.permute.xlu0 %771
  %v774 = vmul.f32 %v767, %v772
  %776 = vrot.lane.b32.xlu0 %v774, 32
  %v777 = vpop.permute.xlu0 %776
  %v779 = vadd.f32 %v769, %v777
  %v780 = vtanh.pop %v779
  %782 = vrot.lane.b32.xlu0 %v780, 32
  %v783 = vpop.permute.xlu0 %782
  %v785 = vmul.f32 %v767, %v783
  %v786 = vpack.c.bf16 %v785, %v785
  %788 = vrot.lane.b32.xlu0 %v786, 64
  %v789 = vpop.permute.xlu0 %788
  %v791 = vsel %vm140, %v789, 0
  %793 = vmatprep.subr.bf16.mxu0 0
  %794 = vmatpush1.bf16.msra.mxu0 %v136
  %795 = vmatprep.subr.bf16.mxu0 0
  %796 = vmatpush1.bf16.msra.mxu0 %v137
  %797 = vmatprep.subr.bf16.mxu0 0
  %798 = vmatpush1.bf16.msra.mxu0 0
  %799 = vmatprep.subr.bf16.mxu0 0
  %800 = vmatpush1.bf16.msra.mxu0 0
  %801 = vmatprep.subr.bf16.mxu0 0
  %802 = vmatpush1.bf16.msra.mxu0 0
  %803 = vmatprep.subr.bf16.mxu0 0
  %804 = vmatpush1.bf16.msra.mxu0 0
  %805 = vmatprep.subr.bf16.mxu0 0
  %806 = vmatpush1.bf16.msra.mxu0 0
  %807 = vmatprep.subr.bf16.mxu0 0
  %808 = vmatpush1.bf16.msra.mxu0 0
  %809 = vmatprep.subr.bf16.mxu0 0
  %810 = vmatpush1.bf16.msra.mxu0 0
  %811 = vmatprep.subr.bf16.mxu0 0
  %812 = vmatpush1.bf16.msra.mxu0 0
  %813 = vmatprep.subr.bf16.mxu0 0
  %814 = vmatpush1.bf16.msra.mxu0 0
  %815 = vmatprep.subr.bf16.mxu0 0
  %816 = vmatpush1.bf16.msra.mxu0 0
  %817 = vmatprep.subr.bf16.mxu0 0
  %818 = vmatpush1.bf16.msra.mxu0 0
  %819 = vmatprep.subr.bf16.mxu0 0
  %820 = vmatpush1.bf16.msra.mxu0 0
  %821 = vmatprep.subr.bf16.mxu0 0
  %822 = vmatpush1.bf16.msra.mxu0 0
  %823 = vmatprep.subr.bf16.mxu0 0
  %824 = vmatpush1.bf16.msra.mxu0 0
  %825 = vmatprep.mubr.bf16.mxu0 0
  %826 = vmatmul.mubr.bf16.gmra.mrb[0].mxu0 %v791
  %v827 = vpop.f32.mrb[0].mxu0
  %v828 = vadd.f32 0.0, %v827
  %v829 = vpop.f32.mrb[0].mxu0
  %v830 = vpop.f32.mrb[0].mxu0
  %v831 = vpop.f32.mrb[0].mxu0
  %832 = vdwg.mxu0
  %v834 = vrot.slane %v828, 6
  %v836 = vadd.f32 %v115, %v834
  %v837 = vrot.slane %v786, 1
  %838 = vrot.lane.b32.xlu0 %v837, 64
  %v839 = vpop.permute.xlu0 %838
  %v841 = vsel %vm140, %v839, 0
  %843 = vmatprep.subr.bf16.mxu0 0
  %844 = vmatpush1.bf16.msra.mxu0 %v193
  %845 = vmatprep.subr.bf16.mxu0 0
  %846 = vmatpush1.bf16.msra.mxu0 %v194
  %847 = vmatprep.subr.bf16.mxu0 0
  %848 = vmatpush1.bf16.msra.mxu0 0
  %849 = vmatprep.subr.bf16.mxu0 0
  %850 = vmatpush1.bf16.msra.mxu0 0
  %851 = vmatprep.subr.bf16.mxu0 0
  %852 = vmatpush1.bf16.msra.mxu0 0
  %853 = vmatprep.subr.bf16.mxu0 0
  %854 = vmatpush1.bf16.msra.mxu0 0
  %855 = vmatprep.subr.bf16.mxu0 0
  %856 = vmatpush1.bf16.msra.mxu0 0
  %857 = vmatprep.subr.bf16.mxu0 0
  %858 = vmatpush1.bf16.msra.mxu0 0
  %859 = vmatprep.subr.bf16.mxu0 0
  %860 = vmatpush1.bf16.msra.mxu0 0
  %861 = vmatprep.subr.bf16.mxu0 0
  %862 = vmatpush1.bf16.msra.mxu0 0
  %863 = vmatprep.subr.bf16.mxu0 0
  %864 = vmatpush1.bf16.msra.mxu0 0
  %865 = vmatprep.subr.bf16.mxu0 0
  %866 = vmatpush1.bf16.msra.mxu0 0
  %867 = vmatprep.subr.bf16.mxu0 0
  %868 = vmatpush1.bf16.msra.mxu0 0
  %869 = vmatprep.subr.bf16.mxu0 0
  %870 = vmatpush1.bf16.msra.mxu0 0
  %871 = vmatprep.subr.bf16.mxu0 0
  %872 = vmatpush1.bf16.msra.mxu0 0
  %873 = vmatprep.subr.bf16.mxu0 0
  %874 = vmatpush1.bf16.msra.mxu0 0
  %875 = vmatprep.mubr.bf16.mxu0 0
  %876 = vmatmul.mubr.bf16.gmra.mrb[0].mxu0 %v841
  %v877 = vpop.f32.mrb[0].mxu0
  %v878 = vadd.f32 0.0, %v877
  %v879 = vpop.f32.mrb[0].mxu0
  %v880 = vpop.f32.mrb[0].mxu0
  %v881 = vpop.f32.mrb[0].mxu0
  %882 = vdwg.mxu0
  %v884 = vrot.slane %v878, 4
  %v886 = vadd.f32 %v113, %v884
  %v888 = vrot.slane %v836, 2
  %v891 = vrot.slane %v886, 2
  %v893 = vsel %vm244, %v888, %v891
  %v894 = vxor.u32 %v893, 2147483648
  %v895 = vmul.f32 %v894, 1.442695
  %v896 = vpow.pop %v895
  %v897 = vadd.f32 %v896, 1.0
  %v898 = vrcp.pop %v897
  %v899 = vmul.f32 1.0, %v898
  %v900 = vtanh.pop %v893
  %v901 = vmul.f32 %v899, %v779
  %903 = vrot.lane.b32.xlu0 %v900, 32
  %v904 = vpop.permute.xlu0 %903
  %v906 = vmul.f32 %v899, %v904
  %908 = vrot.lane.b32.xlu0 %v906, 32
  %v909 = vpop.permute.xlu0 %908
  %v911 = vadd.f32 %v901, %v909
  %v912 = vtanh.pop %v911
  %914 = vrot.lane.b32.xlu0 %v912, 32
  %v915 = vpop.permute.xlu0 %914
  %v917 = vmul.f32 %v899, %v915
  %v918 = vpack.c.bf16 %v917, %v917
  %920 = vrot.lane.b32.xlu0 %v918, 64
  %v921 = vpop.permute.xlu0 %920
  %v923 = vsel %vm140, %v921, 0
  %925 = vmatprep.subr.bf16.mxu0 0
  %926 = vmatpush1.bf16.msra.mxu0 %v136
  %927 = vmatprep.subr.bf16.mxu0 0
  %928 = vmatpush1.bf16.msra.mxu0 %v137
  %929 = vmatprep.subr.bf16.mxu0 0
  %930 = vmatpush1.bf16.msra.mxu0 0
  %931 = vmatprep.subr.bf16.mxu0 0
  %932 = vmatpush1.bf16.msra.mxu0 0
  %933 = vmatprep.subr.bf16.mxu0 0
  %934 = vmatpush1.bf16.msra.mxu0 0
  %935 = vmatprep.subr.bf16.mxu0 0
  %936 = vmatpush1.bf16.msra.mxu0 0
  %937 = vmatprep.subr.bf16.mxu0 0
  %938 = vmatpush1.bf16.msra.mxu0 0
  %939 = vmatprep.subr.bf16.mxu0 0
  %940 = vmatpush1.bf16.msra.mxu0 0
  %941 = vmatprep.subr.bf16.mxu0 0
  %942 = vmatpush1.bf16.msra.mxu0 0
  %943 = vmatprep.subr.bf16.mxu0 0
  %944 = vmatpush1.bf16.msra.mxu0 0
  %945 = vmatprep.subr.bf16.mxu0 0
  %946 = vmatpush1.bf16.msra.mxu0 0
  %947 = vmatprep.subr.bf16.mxu0 0
  %948 = vmatpush1.bf16.msra.mxu0 0
  %949 = vmatprep.subr.bf16.mxu0 0
  %950 = vmatpush1.bf16.msra.mxu0 0
  %951 = vmatprep.subr.bf16.mxu0 0
  %952 = vmatpush1.bf16.msra.mxu0 0
  %953 = vmatprep.subr.bf16.mxu0 0
  %954 = vmatpush1.bf16.msra.mxu0 0
  %955 = vmatprep.subr.bf16.mxu0 0
  %956 = vmatpush1.bf16.msra.mxu0 0
  %957 = vmatprep.mubr.bf16.mxu0 0
  %958 = vmatmul.mubr.bf16.gmra.mrb[0].mxu0 %v923
  %v959 = vpop.f32.mrb[0].mxu0
  %v960 = vadd.f32 0.0, %v959
  %v961 = vpop.f32.mrb[0].mxu0
  %v962 = vpop.f32.mrb[0].mxu0
  %v963 = vpop.f32.mrb[0].mxu0
  %964 = vdwg.mxu0
  %v966 = vrot.slane %v960, 4
  %v968 = vadd.f32 %v115, %v966
  %v969 = vrot.slane %v918, 1
  %970 = vrot.lane.b32.xlu0 %v969, 64
  %v971 = vpop.permute.xlu0 %970
  %v973 = vsel %vm140, %v971, 0
  %975 = vmatprep.subr.bf16.mxu0 0
  %976 = vmatpush1.bf16.msra.mxu0 %v193
  %977 = vmatprep.subr.bf16.mxu0 0
  %978 = vmatpush1.bf16.msra.mxu0 %v194
  %979 = vmatprep.subr.bf16.mxu0 0
  %980 = vmatpush1.bf16.msra.mxu0 0
  %981 = vmatprep.subr.bf16.mxu0 0
  %982 = vmatpush1.bf16.msra.mxu0 0
  %983 = vmatprep.subr.bf16.mxu0 0
  %984 = vmatpush1.bf16.msra.mxu0 0
  %985 = vmatprep.subr.bf16.mxu0 0
  %986 = vmatpush1.bf16.msra.mxu0 0
  %987 = vmatprep.subr.bf16.mxu0 0
  %988 = vmatpush1.bf16.msra.mxu0 0
  %989 = vmatprep.subr.bf16.mxu0 0
  %990 = vmatpush1.bf16.msra.mxu0 0
  %991 = vmatprep.subr.bf16.mxu0 0
  %992 = vmatpush1.bf16.msra.mxu0 0
  %993 = vmatprep.subr.bf16.mxu0 0
  %994 = vmatpush1.bf16.msra.mxu0 0
  %995 = vmatprep.subr.bf16.mxu0 0
  %996 = vmatpush1.bf16.msra.mxu0 0
  %997 = vmatprep.subr.bf16.mxu0 0
  %998 = vmatpush1.bf16.msra.mxu0 0
  %999 = vmatprep.subr.bf16.mxu0 0
  %1000 = vmatpush1.bf16.msra.mxu0 0
  %1001 = vmatprep.subr.bf16.mxu0 0
  %1002 = vmatpush1.bf16.msra.mxu0 0
  %1003 = vmatprep.subr.bf16.mxu0 0
  %1004 = vmatpush1.bf16.msra.mxu0 0
  %1005 = vmatprep.subr.bf16.mxu0 0
  %1006 = vmatpush1.bf16.msra.mxu0 0
  %1007 = vmatprep.mubr.bf16.mxu0 0
  %1008 = vmatmul.mubr.bf16.gmra.mrb[0].mxu0 %v973
  %v1009 = vpop.f32.mrb[0].mxu0
  %v1010 = vadd.f32 0.0, %v1009
  %v1011 = vpop.f32.mrb[0].mxu0
  %v1012 = vpop.f32.mrb[0].mxu0
  %v1013 = vpop.f32.mrb[0].mxu0
  %1014 = vdwg.mxu0
  %v1016 = vrot.slane %v1010, 6
  %v1018 = vadd.f32 %v113, %v1016
  %v1020 = vrot.slane %v968, 4
  %v1022 = vsel %vm244, %v1020, %v1018
  %v1023 = vxor.u32 %v1022, 2147483648
  %v1024 = vmul.f32 %v1023, 1.442695
  %v1025 = vpow.pop %v1024
  %v1026 = vadd.f32 %v1025, 1.0
  %v1027 = vrcp.pop %v1026
  %v1028 = vmul.f32 1.0, %v1027
  %v1029 = vtanh.pop %v1022
  %v1030 = vmul.f32 %v1028, %v911
  %1032 = vrot.lane.b32.xlu0 %v1029, 32
  %v1033 = vpop.permute.xlu0 %1032
  %v1035 = vmul.f32 %v1028, %v1033
  %1037 = vrot.lane.b32.xlu0 %v1035, 32
  %v1038 = vpop.permute.xlu0 %1037
  %v1040 = vadd.f32 %v1030, %v1038
  %v1041 = vtanh.pop %v1040
  %1043 = vrot.lane.b32.xlu0 %v1041, 32
  %v1044 = vpop.permute.xlu0 %1043
  %v1046 = vmul.f32 %v1028, %v1044
  %v1047 = vpack.c.bf16 %v1046, %v1046
  %1049 = vrot.lane.b32.xlu0 %v1047, 64
  %v1050 = vpop.permute.xlu0 %1049
  %v1052 = vsel %vm140, %v1050, 0
  %1054 = vmatprep.subr.bf16.mxu0 0
  %1055 = vmatpush1.bf16.msra.mxu0 %v136
  %1056 = vmatprep.subr.bf16.mxu0 0
  %1057 = vmatpush1.bf16.msra.mxu0 %v137
  %1058 = vmatprep.subr.bf16.mxu0 0
  %1059 = vmatpush1.bf16.msra.mxu0 0
  %1060 = vmatprep.subr.bf16.mxu0 0
  %1061 = vmatpush1.bf16.msra.mxu0 0
  %1062 = vmatprep.subr.bf16.mxu0 0
  %1063 = vmatpush1.bf16.msra.mxu0 0
  %1064 = vmatprep.subr.bf16.mxu0 0
  %1065 = vmatpush1.bf16.msra.mxu0 0
  %1066 = vmatprep.subr.bf16.mxu0 0
  %1067 = vmatpush1.bf16.msra.mxu0 0
  %1068 = vmatprep.subr.bf16.mxu0 0
  %1069 = vmatpush1.bf16.msra.mxu0 0
  %1070 = vmatprep.subr.bf16.mxu0 0
  %1071 = vmatpush1.bf16.msra.mxu0 0
  %1072 = vmatprep.subr.bf16.mxu0 0
  %1073 = vmatpush1.bf16.msra.mxu0 0
  %1074 = vmatprep.subr.bf16.mxu0 0
  %1075 = vmatpush1.bf16.msra.mxu0 0
  %1076 = vmatprep.subr.bf16.mxu0 0
  %1077 = vmatpush1.bf16.msra.mxu0 0
  %1078 = vmatprep.subr.bf16.mxu0 0
  %1079 = vmatpush1.bf16.msra.mxu0 0
  %1080 = vmatprep.subr.bf16.mxu0 0
  %1081 = vmatpush1.bf16.msra.mxu0 0
  %1082 = vmatprep.subr.bf16.mxu0 0
  %1083 = vmatpush1.bf16.msra.mxu0 0
  %1084 = vmatprep.subr.bf16.mxu0 0
  %1085 = vmatpush1.bf16.msra.mxu0 0
  %1086 = vmatprep.mubr.bf16.mxu0 0
  %1087 = vmatmul.mubr.bf16.gmra.mrb[0].mxu0 %v1052
  %v1088 = vpop.f32.mrb[0].mxu0
  %v1089 = vadd.f32 0.0, %v1088
  %v1090 = vpop.f32.mrb[0].mxu0
  %v1091 = vpop.f32.mrb[0].mxu0
  %v1092 = vpop.f32.mrb[0].mxu0
  %1093 = vdwg.mxu0
  %v1095 = vrot.slane %v1089, 2
  %v1097 = vadd.f32 %v115, %v1095
  %v1098 = vrot.slane %v1047, 1
  %1099 = vrot.lane.b32.xlu0 %v1098, 64
  %v1100 = vpop.permute.xlu0 %1099
  %v1102 = vsel %vm140, %v1100, 0
  %1104 = vmatprep.subr.bf16.mxu0 0
  %1105 = vmatpush1.bf16.msra.mxu0 %v193
  %1106 = vmatprep.subr.bf16.mxu0 0
  %1107 = vmatpush1.bf16.msra.mxu0 %v194
  %1108 = vmatprep.subr.bf16.mxu0 0
  %1109 = vmatpush1.bf16.msra.mxu0 0
  %1110 = vmatprep.subr.bf16.mxu0 0
  %1111 = vmatpush1.bf16.msra.mxu0 0
  %1112 = vmatprep.subr.bf16.mxu0 0
  %1113 = vmatpush1.bf16.msra.mxu0 0
  %1114 = vmatprep.subr.bf16.mxu0 0
  %1115 = vmatpush1.bf16.msra.mxu0 0
  %1116 = vmatprep.subr.bf16.mxu0 0
  %1117 = vmatpush1.bf16.msra.mxu0 0
  %1118 = vmatprep.subr.bf16.mxu0 0
  %1119 = vmatpush1.bf16.msra.mxu0 0
  %1120 = vmatprep.subr.bf16.mxu0 0
  %1121 = vmatpush1.bf16.msra.mxu0 0
  %1122 = vmatprep.subr.bf16.mxu0 0
  %1123 = vmatpush1.bf16.msra.mxu0 0
  %1124 = vmatprep.subr.bf16.mxu0 0
  %1125 = vmatpush1.bf16.msra.mxu0 0
  %1126 = vmatprep.subr.bf16.mxu0 0
  %1127 = vmatpush1.bf16.msra.mxu0 0
  %1128 = vmatprep.subr.bf16.mxu0 0
  %1129 = vmatpush1.bf16.msra.mxu0 0
  %1130 = vmatprep.subr.bf16.mxu0 0
  %1131 = vmatpush1.bf16.msra.mxu0 0
  %1132 = vmatprep.subr.bf16.mxu0 0
  %1133 = vmatpush1.bf16.msra.mxu0 0
  %1134 = vmatprep.subr.bf16.mxu0 0
  %1135 = vmatpush1.bf16.msra.mxu0 0
  %1136 = vmatprep.mubr.bf16.mxu0 0
  %1137 = vmatmul.mubr.bf16.gmra.mrb[0].mxu0 %v1102
  %v1138 = vpop.f32.mrb[0].mxu0
  %v1139 = vadd.f32 0.0, %v1138
  %v1140 = vpop.f32.mrb[0].mxu0
  %v1141 = vpop.f32.mrb[0].mxu0
  %v1142 = vpop.f32.mrb[0].mxu0
  %1143 = vdwg.mxu0
  %v1144 = vadd.f32 %v113, %v1139
  %v1146 = vrot.slane %v1097, 6
  %v1149 = vrot.slane %v1144, 6
  %v1151 = vsel %vm244, %v1146, %v1149
  %v1152 = vxor.u32 %v1151, 2147483648
  %v1153 = vmul.f32 %v1152, 1.442695
  %v1154 = vpow.pop %v1153
  %v1155 = vadd.f32 %v1154, 1.0
  %v1156 = vrcp.pop %v1155
  %v1157 = vmul.f32 1.0, %v1156
  %v1158 = vtanh.pop %v1151
  %v1159 = vmul.f32 %v1157, %v1040
  %1161 = vrot.lane.b32.xlu0 %v1158, 32
  %v1162 = vpop.permute.xlu0 %1161
  %v1164 = vmul.f32 %v1157, %v1162
  %1166 = vrot.lane.b32.xlu0 %v1164, 32
  %v1167 = vpop.permute.xlu0 %1166
  %v1169 = vadd.f32 %v1159, %v1167
  %v1170 = vtanh.pop %v1169
  %1172 = vrot.lane.b32.xlu0 %v1170, 32
  %v1173 = vpop.permute.xlu0 %1172
  %v1175 = vmul.f32 %v1157, %v1173
  %1177 = vrot.lane.b32.xlu0 %v269, 64
  %v1178 = vpop.permute.xlu0 %1177
  %v1181 = vrot.slane %v1175, 2
  %1182 = vrot.lane.b32.xlu0 %v1181, 96
  %v1183 = vpop.permute.xlu0 %1182
  %v1185 = vsel %vm140, %v1178, %v1183
  %1187 = vrot.lane.b32.xlu0 %v401, 64
  %v1188 = vpop.permute.xlu0 %1187
  %v1191 = vrot.slane %v1046, 2
  %1192 = vrot.lane.b32.xlu0 %v1191, 96
  %v1193 = vpop.permute.xlu0 %1192
  %v1195 = vsel %vm140, %v1188, %v1193
  %1197 = vrot.lane.b32.xlu0 %v530, 64
  %v1198 = vpop.permute.xlu0 %1197
  %v1201 = vrot.slane %v917, 2
  %1202 = vrot.lane.b32.xlu0 %v1201, 96
  %v1203 = vpop.permute.xlu0 %1202
  %v1205 = vsel %vm140, %v1198, %v1203
  %1207 = vrot.lane.b32.xlu0 %v659, 64
  %v1208 = vpop.permute.xlu0 %1207
  %v1211 = vrot.slane %v785, 2
  %1212 = vrot.lane.b32.xlu0 %v1211, 96
  %v1213 = vpop.permute.xlu0 %1212
  %v1215 = vsel %vm140, %v1208, %v1213
  %1216 = vrot.lane.b32.xlu0 %v785, 64
  %v1217 = vpop.permute.xlu0 %1216
  %v1219 = vrot.slane %v659, 2
  %1220 = vrot.lane.b32.xlu0 %v1219, 96
  %v1221 = vpop.permute.xlu0 %1220
  %v1223 = vsel %vm140, %v1217, %v1221
  %1224 = vrot.lane.b32.xlu0 %v917, 64
  %v1225 = vpop.permute.xlu0 %1224
  %v1227 = vrot.slane %v530, 2
  %1228 = vrot.lane.b32.xlu0 %v1227, 96
  %v1229 = vpop.permute.xlu0 %1228
  %v1231 = vsel %vm140, %v1225, %v1229
  %1232 = vrot.lane.b32.xlu0 %v1046, 64
  %v1233 = vpop.permute.xlu0 %1232
  %v1235 = vrot.slane %v401, 2
  %1236 = vrot.lane.b32.xlu0 %v1235, 96
  %v1237 = vpop.permute.xlu0 %1236
  %v1239 = vsel %vm140, %v1233, %v1237
  %1240 = vrot.lane.b32.xlu0 %v1175, 64
  %v1241 = vpop.permute.xlu0 %1240
  %v1243 = vrot.slane %v269, 2
  %1244 = vrot.lane.b32.xlu0 %v1243, 96
  %v1245 = vpop.permute.xlu0 %1244
  %v1247 = vsel %vm140, %v1241, %v1245
  %v1249 = vrot.slane %v1195, 6
  %v1252 = vrot.slane %v1205, 4
  %v1255 = vrot.slane %v1215, 2
  %v1258 = vrot.slane %v1231, 6
  %v1261 = vrot.slane %v1239, 4
  %v1264 = vrot.slane %v1247, 2
  %v1266 = vsel %vm244, %v1185, %v1249
  %vm1267 = vcmask 1043456
  %v1268 = vsel %vm1267, %v1266, %v1252
  %vm1269 = vcmask 1045504
  %v1270 = vsel %vm1269, %v1268, %v1255
  %v1271 = vsel %vm244, %v1223, %v1258
  %v1272 = vsel %vm1267, %v1271, %v1261
  %v1273 = vsel %vm1269, %v1272, %v1264
  %v1274 = vld [vmem:[%s4] sm:$0xf]
  %v1275 = vld [vmem:[%s4 + $0x4] sm:$0xf]
  %v1276 = vld [vmem:[%s4 + $0x8] sm:$0xf]
  %v1277 = vld [vmem:[%s4 + $0xc] sm:$0xf]
  %v1278 = vld [vmem:[%s4 + $0x10] sm:$0xf]
  %v1279 = vld [vmem:[%s4 + $0x14] sm:$0xf]
  %v1280 = vld [vmem:[%s4 + $0x18] sm:$0xf]
  %v1281 = vld [vmem:[%s4 + $0x1c] sm:$0xf]
  %v1282 = vpack.c.bf16 %v1273, %v1270
  %v1283 = vld [vmem:[%s6] sm:$0x1]
  %v1285 = vlaneseq
  %v1286 = vshrl.u32 %v1285, 7
  %v1287 = vsub.s32 0, %v1286
  %v1288 = vrot.slane %v1283, %v1287
  %v1298 = vunpack.c.l.b16 %v1274
  %v1299 = vunpack.c.l.b16 %v1275
  %v1300 = vunpack.c.l.b16 %v1276
  %v1301 = vunpack.c.l.b16 %v1277
  %v1302 = vunpack.c.l.b16 %v1278
  %v1303 = vunpack.c.l.b16 %v1279
  %v1304 = vunpack.c.l.b16 %v1280
  %v1305 = vunpack.c.l.b16 %v1281
  %v1306 = vpack.c.b16 %v1299, %v1298
  %v1307 = vpack.c.b16 %v1301, %v1300
  %v1308 = vpack.c.b16 %v1303, %v1302
  %v1309 = vpack.c.b16 %v1305, %v1304
  %vm1314 = vcmask 523264
  %v1316 = vsel %vm1314, %v1282, 0
  %1318 = vmatprep.subr.bf16.mxu0 0
  %1319 = vmatpush1.bf16.msra.mxu0 %v1306
  %1320 = vmatprep.subr.bf16.mxu0 0
  %1321 = vmatpush1.bf16.msra.mxu0 %v1307
  %1322 = vmatprep.subr.bf16.mxu0 0
  %1323 = vmatpush1.bf16.msra.mxu0 %v1308
  %1324 = vmatprep.subr.bf16.mxu0 0
  %1325 = vmatpush1.bf16.msra.mxu0 %v1309
  %1326 = vmatprep.subr.bf16.mxu0 0
  %1327 = vmatpush1.bf16.msra.mxu0 0
  %1328 = vmatprep.subr.bf16.mxu0 0
  %1329 = vmatpush1.bf16.msra.mxu0 0
  %1330 = vmatprep.subr.bf16.mxu0 0
  %1331 = vmatpush1.bf16.msra.mxu0 0
  %1332 = vmatprep.subr.bf16.mxu0 0
  %1333 = vmatpush1.bf16.msra.mxu0 0
  %1334 = vmatprep.subr.bf16.mxu0 0
  %1335 = vmatpush1.bf16.msra.mxu0 0
  %1336 = vmatprep.subr.bf16.mxu0 0
  %1337 = vmatpush1.bf16.msra.mxu0 0
  %1338 = vmatprep.subr.bf16.mxu0 0
  %1339 = vmatpush1.bf16.msra.mxu0 0
  %1340 = vmatprep.subr.bf16.mxu0 0
  %1341 = vmatpush1.bf16.msra.mxu0 0
  %1342 = vmatprep.subr.bf16.mxu0 0
  %1343 = vmatpush1.bf16.msra.mxu0 0
  %1344 = vmatprep.subr.bf16.mxu0 0
  %1345 = vmatpush1.bf16.msra.mxu0 0
  %1346 = vmatprep.subr.bf16.mxu0 0
  %1347 = vmatpush1.bf16.msra.mxu0 0
  %1348 = vmatprep.subr.bf16.mxu0 0
  %1349 = vmatpush1.bf16.msra.mxu0 0
  %1350 = vmatprep.mubr.bf16.mxu0 0
  %1351 = vmatmul.mubr.bf16.gmra.mrb[0].mxu0 %v1316
  %v1352 = vpop.f32.mrb[0].mxu0
  %v1353 = vadd.f32 %v1288, %v1352
  %v1354 = vpop.f32.mrb[0].mxu0
  %v1355 = vpop.f32.mrb[0].mxu0
  %v1356 = vadd.f32 %v1288, %v1355
  %v1357 = vpop.f32.mrb[0].mxu0
  %1358 = vdwg.mxu0
  %v1359 = vld [vmem:[%s5] sm:$0xf]
  %v1360 = vld [vmem:[%s5 + $0x4] sm:$0xf]
  %v1361 = vld [vmem:[%s5 + $0x8] sm:$0xf]
  %v1362 = vld [vmem:[%s5 + $0xc] sm:$0xf]
  %v1367 = vunpack.c.l.b16 %v1359
  %v1368 = vunpack.c.l.b16 %v1360
  %v1369 = vunpack.c.l.b16 %v1361
  %v1370 = vunpack.c.l.b16 %v1362
  %v1371 = vpack.c.b16 %v1368, %v1367
  %v1372 = vpack.c.b16 %v1370, %v1369
  %1375 = vmatprep.subr.bf16.mxu0 0
  %1376 = vmatpush1.bf16.msra.mxu0 %v1371
  %1377 = vmatprep.subr.bf16.mxu0 0
  %1378 = vmatpush1.bf16.msra.mxu0 %v1372
  %1379 = vmatprep.subr.bf16.mxu0 0
  %1380 = vmatpush1.bf16.msra.mxu0 0
  %1381 = vmatprep.subr.bf16.mxu0 0
  %1382 = vmatpush1.bf16.msra.mxu0 0
  %1383 = vmatprep.subr.bf16.mxu0 0
  %1384 = vmatpush1.bf16.msra.mxu0 0
  %1385 = vmatprep.subr.bf16.mxu0 0
  %1386 = vmatpush1.bf16.msra.mxu0 0
  %1387 = vmatprep.subr.bf16.mxu0 0
  %1388 = vmatpush1.bf16.msra.mxu0 0
  %1389 = vmatprep.subr.bf16.mxu0 0
  %1390 = vmatpush1.bf16.msra.mxu0 0
  %1391 = vmatprep.subr.bf16.mxu0 0
  %1392 = vmatpush1.bf16.msra.mxu0 0
  %1393 = vmatprep.subr.bf16.mxu0 0
  %1394 = vmatpush1.bf16.msra.mxu0 0
  %1395 = vmatprep.subr.bf16.mxu0 0
  %1396 = vmatpush1.bf16.msra.mxu0 0
  %1397 = vmatprep.subr.bf16.mxu0 0
  %1398 = vmatpush1.bf16.msra.mxu0 0
  %1399 = vmatprep.subr.bf16.mxu0 0
  %1400 = vmatpush1.bf16.msra.mxu0 0
  %1401 = vmatprep.subr.bf16.mxu0 0
  %1402 = vmatpush1.bf16.msra.mxu0 0
  %1403 = vmatprep.subr.bf16.mxu0 0
  %1404 = vmatpush1.bf16.msra.mxu0 0
  %1405 = vmatprep.subr.bf16.mxu0 0
  %1406 = vmatpush1.bf16.msra.mxu0 0
  %1407 = vmatprep.mubr.bf16.mxu0 0
  %1408 = vmatmul.mubr.bf16.gmra.mrb[0].mxu0 %v142
  %v1409 = vpop.f32.mrb[0].mxu0
  %v1410 = vadd.f32 0.0, %v1409
  %v1411 = vpop.f32.mrb[0].mxu0
  %v1412 = vpop.f32.mrb[0].mxu0
  %v1413 = vpop.f32.mrb[0].mxu0
  %1414 = vdwg.mxu0
  %v1415 = vadd.f32 %v1353, %v1410
  %v1416 = vxor.u32 %v1415, 2147483648
  %v1417 = vmul.f32 %v1416, 1.442695
  %v1418 = vpow.pop %v1417
  %v1419 = vadd.f32 %v1418, 1.0
  %v1420 = vrcp.pop %v1419
  %v1421 = vmul.f32 1.0, %v1420
  %v1422 = vtanh.pop %v1415
  %v1423 = vmul.f32 %v1421, 0.0
  %1425 = vrot.lane.b32.xlu0 %v1422, 32
  %v1426 = vpop.permute.xlu0 %1425
  %v1428 = vmul.f32 %v1421, %v1426
  %1430 = vrot.lane.b32.xlu0 %v1428, 32
  %v1431 = vpop.permute.xlu0 %1430
  %v1433 = vadd.f32 %v1423, %v1431
  %v1434 = vtanh.pop %v1433
  %1436 = vrot.lane.b32.xlu0 %v1434, 32
  %v1437 = vpop.permute.xlu0 %1436
  %v1439 = vmul.f32 %v1421, %v1437
  %v1440 = vpack.c.bf16 %v1439, %v1439
  %1442 = vrot.lane.b32.xlu0 %v1440, 64
  %v1443 = vpop.permute.xlu0 %1442
  %v1445 = vsel %vm140, %v1443, 0
  %1447 = vmatprep.subr.bf16.mxu0 0
  %1448 = vmatpush1.bf16.msra.mxu0 %v1371
  %1449 = vmatprep.subr.bf16.mxu0 0
  %1450 = vmatpush1.bf16.msra.mxu0 %v1372
  %1451 = vmatprep.subr.bf16.mxu0 0
  %1452 = vmatpush1.bf16.msra.mxu0 0
  %1453 = vmatprep.subr.bf16.mxu0 0
  %1454 = vmatpush1.bf16.msra.mxu0 0
  %1455 = vmatprep.subr.bf16.mxu0 0
  %1456 = vmatpush1.bf16.msra.mxu0 0
  %1457 = vmatprep.subr.bf16.mxu0 0
  %1458 = vmatpush1.bf16.msra.mxu0 0
  %1459 = vmatprep.subr.bf16.mxu0 0
  %1460 = vmatpush1.bf16.msra.mxu0 0
  %1461 = vmatprep.subr.bf16.mxu0 0
  %1462 = vmatpush1.bf16.msra.mxu0 0
  %1463 = vmatprep.subr.bf16.mxu0 0
  %1464 = vmatpush1.bf16.msra.mxu0 0
  %1465 = vmatprep.subr.bf16.mxu0 0
  %1466 = vmatpush1.bf16.msra.mxu0 0
  %1467 = vmatprep.subr.bf16.mxu0 0
  %1468 = vmatpush1.bf16.msra.mxu0 0
  %1469 = vmatprep.subr.bf16.mxu0 0
  %1470 = vmatpush1.bf16.msra.mxu0 0
  %1471 = vmatprep.subr.bf16.mxu0 0
  %1472 = vmatpush1.bf16.msra.mxu0 0
  %1473 = vmatprep.subr.bf16.mxu0 0
  %1474 = vmatpush1.bf16.msra.mxu0 0
  %1475 = vmatprep.subr.bf16.mxu0 0
  %1476 = vmatpush1.bf16.msra.mxu0 0
  %1477 = vmatprep.subr.bf16.mxu0 0
  %1478 = vmatpush1.bf16.msra.mxu0 0
  %1479 = vmatprep.mubr.bf16.mxu0 0
  %1480 = vmatmul.mubr.bf16.gmra.mrb[0].mxu0 %v1445
  %v1481 = vpop.f32.mrb[0].mxu0
  %v1482 = vadd.f32 0.0, %v1481
  %v1483 = vpop.f32.mrb[0].mxu0
  %v1484 = vpop.f32.mrb[0].mxu0
  %v1485 = vpop.f32.mrb[0].mxu0
  %1486 = vdwg.mxu0
  %v1488 = vrot.slane %v1482, 6
  %v1490 = vadd.f32 %v1353, %v1488
  %v1491 = vxor.u32 %v1490, 2147483648
  %v1492 = vmul.f32 %v1491, 1.442695
  %v1493 = vpow.pop %v1492
  %v1494 = vadd.f32 %v1493, 1.0
  %v1495 = vrcp.pop %v1494
  %v1496 = vmul.f32 1.0, %v1495
  %v1497 = vtanh.pop %v1490
  %v1499 = vrot.slane %v1433, 6
  %v1501 = vmul.f32 %v1496, %v1499
  %1503 = vrot.lane.b32.xlu0 %v1497, 32
  %v1504 = vpop.permute.xlu0 %1503
  %v1506 = vmul.f32 %v1496, %v1504
  %1508 = vrot.lane.b32.xlu0 %v1506, 32
  %v1509 = vpop.permute.xlu0 %1508
  %v1511 = vadd.f32 %v1501, %v1509
  %v1512 = vtanh.pop %v1511
  %1514 = vrot.lane.b32.xlu0 %v1512, 32
  %v1515 = vpop.permute.xlu0 %1514
  %v1517 = vmul.f32 %v1496, %v1515
  %v1518 = vpack.c.bf16 %v1517, %v1517
  %v1520 = vrot.slane %v1518, 1
  %1521 = vrot.lane.b32.xlu0 %v1520, 64
  %v1522 = vpop.permute.xlu0 %1521
  %v1524 = vsel %vm140, %v1522, 0
  %1526 = vmatprep.subr.bf16.mxu0 0
  %1527 = vmatpush1.bf16.msra.mxu0 %v1371
  %1528 = vmatprep.subr.bf16.mxu0 0
  %1529 = vmatpush1.bf16.msra.mxu0 %v1372
  %1530 = vmatprep.subr.bf16.mxu0 0
  %1531 = vmatpush1.bf16.msra.mxu0 0
  %1532 = vmatprep.subr.bf16.mxu0 0
  %1533 = vmatpush1.bf16.msra.mxu0 0
  %1534 = vmatprep.subr.bf16.mxu0 0
  %1535 = vmatpush1.bf16.msra.mxu0 0
  %1536 = vmatprep.subr.bf16.mxu0 0
  %1537 = vmatpush1.bf16.msra.mxu0 0
  %1538 = vmatprep.subr.bf16.mxu0 0
  %1539 = vmatpush1.bf16.msra.mxu0 0
  %1540 = vmatprep.subr.bf16.mxu0 0
  %1541 = vmatpush1.bf16.msra.mxu0 0
  %1542 = vmatprep.subr.bf16.mxu0 0
  %1543 = vmatpush1.bf16.msra.mxu0 0
  %1544 = vmatprep.subr.bf16.mxu0 0
  %1545 = vmatpush1.bf16.msra.mxu0 0
  %1546 = vmatprep.subr.bf16.mxu0 0
  %1547 = vmatpush1.bf16.msra.mxu0 0
  %1548 = vmatprep.subr.bf16.mxu0 0
  %1549 = vmatpush1.bf16.msra.mxu0 0
  %1550 = vmatprep.subr.bf16.mxu0 0
  %1551 = vmatpush1.bf16.msra.mxu0 0
  %1552 = vmatprep.subr.bf16.mxu0 0
  %1553 = vmatpush1.bf16.msra.mxu0 0
  %1554 = vmatprep.subr.bf16.mxu0 0
  %1555 = vmatpush1.bf16.msra.mxu0 0
  %1556 = vmatprep.subr.bf16.mxu0 0
  %1557 = vmatpush1.bf16.msra.mxu0 0
  %1558 = vmatprep.mubr.bf16.mxu0 0
  %1559 = vmatmul.mubr.bf16.gmra.mrb[0].mxu0 %v1524
  %v1560 = vpop.f32.mrb[0].mxu0
  %v1561 = vadd.f32 0.0, %v1560
  %v1562 = vpop.f32.mrb[0].mxu0
  %v1563 = vpop.f32.mrb[0].mxu0
  %v1564 = vpop.f32.mrb[0].mxu0
  %1565 = vdwg.mxu0
  %v1567 = vrot.slane %v1561, 4
  %v1569 = vadd.f32 %v1353, %v1567
  %v1570 = vxor.u32 %v1569, 2147483648
  %v1571 = vmul.f32 %v1570, 1.442695
  %v1572 = vpow.pop %v1571
  %v1573 = vadd.f32 %v1572, 1.0
  %v1574 = vrcp.pop %v1573
  %v1575 = vmul.f32 1.0, %v1574
  %v1576 = vtanh.pop %v1569
  %v1578 = vrot.slane %v1511, 6
  %v1580 = vmul.f32 %v1575, %v1578
  %1582 = vrot.lane.b32.xlu0 %v1576, 32
  %v1583 = vpop.permute.xlu0 %1582
  %v1585 = vmul.f32 %v1575, %v1583
  %1587 = vrot.lane.b32.xlu0 %v1585, 32
  %v1588 = vpop.permute.xlu0 %1587
  %v1590 = vadd.f32 %v1580, %v1588
  %v1591 = vtanh.pop %v1590
  %1593 = vrot.lane.b32.xlu0 %v1591, 32
  %v1594 = vpop.permute.xlu0 %1593
  %v1596 = vmul.f32 %v1575, %v1594
  %v1597 = vpack.c.bf16 %v1596, %v1596
  %v1599 = vrot.slane %v1597, 2
  %1600 = vrot.lane.b32.xlu0 %v1599, 64
  %v1601 = vpop.permute.xlu0 %1600
  %v1603 = vsel %vm140, %v1601, 0
  %1605 = vmatprep.subr.bf16.mxu0 0
  %1606 = vmatpush1.bf16.msra.mxu0 %v1371
  %1607 = vmatprep.subr.bf16.mxu0 0
  %1608 = vmatpush1.bf16.msra.mxu0 %v1372
  %1609 = vmatprep.subr.bf16.mxu0 0
  %1610 = vmatpush1.bf16.msra.mxu0 0
  %1611 = vmatprep.subr.bf16.mxu0 0
  %1612 = vmatpush1.bf16.msra.mxu0 0
  %1613 = vmatprep.subr.bf16.mxu0 0
  %1614 = vmatpush1.bf16.msra.mxu0 0
  %1615 = vmatprep.subr.bf16.mxu0 0
  %1616 = vmatpush1.bf16.msra.mxu0 0
  %1617 = vmatprep.subr.bf16.mxu0 0
  %1618 = vmatpush1.bf16.msra.mxu0 0
  %1619 = vmatprep.subr.bf16.mxu0 0
  %1620 = vmatpush1.bf16.msra.mxu0 0
  %1621 = vmatprep.subr.bf16.mxu0 0
  %1622 = vmatpush1.bf16.msra.mxu0 0
  %1623 = vmatprep.subr.bf16.mxu0 0
  %1624 = vmatpush1.bf16.msra.mxu0 0
  %1625 = vmatprep.subr.bf16.mxu0 0
  %1626 = vmatpush1.bf16.msra.mxu0 0
  %1627 = vmatprep.subr.bf16.mxu0 0
  %1628 = vmatpush1.bf16.msra.mxu0 0
  %1629 = vmatprep.subr.bf16.mxu0 0
  %1630 = vmatpush1.bf16.msra.mxu0 0
  %1631 = vmatprep.subr.bf16.mxu0 0
  %1632 = vmatpush1.bf16.msra.mxu0 0
  %1633 = vmatprep.subr.bf16.mxu0 0
  %1634 = vmatpush1.bf16.msra.mxu0 0
  %1635 = vmatprep.subr.bf16.mxu0 0
  %1636 = vmatpush1.bf16.msra.mxu0 0
  %1637 = vmatprep.mubr.bf16.mxu0 0
  %1638 = vmatmul.mubr.bf16.gmra.mrb[0].mxu0 %v1603
  %v1639 = vpop.f32.mrb[0].mxu0
  %v1640 = vadd.f32 0.0, %v1639
  %v1641 = vpop.f32.mrb[0].mxu0
  %v1642 = vpop.f32.mrb[0].mxu0
  %v1643 = vpop.f32.mrb[0].mxu0
  %1644 = vdwg.mxu0
  %v1646 = vrot.slane %v1640, 2
  %v1648 = vadd.f32 %v1353, %v1646
  %v1649 = vxor.u32 %v1648, 2147483648
  %v1650 = vmul.f32 %v1649, 1.442695
  %v1651 = vpow.pop %v1650
  %v1652 = vadd.f32 %v1651, 1.0
  %v1653 = vrcp.pop %v1652
  %v1654 = vmul.f32 1.0, %v1653
  %v1655 = vtanh.pop %v1648
  %v1657 = vrot.slane %v1590, 6
  %v1659 = vmul.f32 %v1654, %v1657
  %1661 = vrot.lane.b32.xlu0 %v1655, 32
  %v1662 = vpop.permute.xlu0 %1661
  %v1664 = vmul.f32 %v1654, %v1662
  %1666 = vrot.lane.b32.xlu0 %v1664, 32
  %v1667 = vpop.permute.xlu0 %1666
  %v1669 = vadd.f32 %v1659, %v1667
  %v1670 = vtanh.pop %v1669
  %1672 = vrot.lane.b32.xlu0 %v1670, 32
  %v1673 = vpop.permute.xlu0 %1672
  %v1675 = vmul.f32 %v1654, %v1673
  %v1676 = vpack.c.bf16 %v1675, %v1675
  %v1678 = vrot.slane %v1676, 3
  %1679 = vrot.lane.b32.xlu0 %v1678, 64
  %v1680 = vpop.permute.xlu0 %1679
  %v1682 = vsel %vm140, %v1680, 0
  %1684 = vmatprep.subr.bf16.mxu0 0
  %1685 = vmatpush1.bf16.msra.mxu0 %v1371
  %1686 = vmatprep.subr.bf16.mxu0 0
  %1687 = vmatpush1.bf16.msra.mxu0 %v1372
  %1688 = vmatprep.subr.bf16.mxu0 0
  %1689 = vmatpush1.bf16.msra.mxu0 0
  %1690 = vmatprep.subr.bf16.mxu0 0
  %1691 = vmatpush1.bf16.msra.mxu0 0
  %1692 = vmatprep.subr.bf16.mxu0 0
  %1693 = vmatpush1.bf16.msra.mxu0 0
  %1694 = vmatprep.subr.bf16.mxu0 0
  %1695 = vmatpush1.bf16.msra.mxu0 0
  %1696 = vmatprep.subr.bf16.mxu0 0
  %1697 = vmatpush1.bf16.msra.mxu0 0
  %1698 = vmatprep.subr.bf16.mxu0 0
  %1699 = vmatpush1.bf16.msra.mxu0 0
  %1700 = vmatprep.subr.bf16.mxu0 0
  %1701 = vmatpush1.bf16.msra.mxu0 0
  %1702 = vmatprep.subr.bf16.mxu0 0
  %1703 = vmatpush1.bf16.msra.mxu0 0
  %1704 = vmatprep.subr.bf16.mxu0 0
  %1705 = vmatpush1.bf16.msra.mxu0 0
  %1706 = vmatprep.subr.bf16.mxu0 0
  %1707 = vmatpush1.bf16.msra.mxu0 0
  %1708 = vmatprep.subr.bf16.mxu0 0
  %1709 = vmatpush1.bf16.msra.mxu0 0
  %1710 = vmatprep.subr.bf16.mxu0 0
  %1711 = vmatpush1.bf16.msra.mxu0 0
  %1712 = vmatprep.subr.bf16.mxu0 0
  %1713 = vmatpush1.bf16.msra.mxu0 0
  %1714 = vmatprep.subr.bf16.mxu0 0
  %1715 = vmatpush1.bf16.msra.mxu0 0
  %1716 = vmatprep.mubr.bf16.mxu0 0
  %1717 = vmatmul.mubr.bf16.gmra.mrb[0].mxu0 %v1682
  %v1718 = vpop.f32.mrb[0].mxu0
  %v1719 = vadd.f32 0.0, %v1718
  %v1720 = vpop.f32.mrb[0].mxu0
  %v1721 = vpop.f32.mrb[0].mxu0
  %v1722 = vpop.f32.mrb[0].mxu0
  %1723 = vdwg.mxu0
  %v1724 = vadd.f32 %v1356, %v1719
  %v1725 = vxor.u32 %v1724, 2147483648
  %v1726 = vmul.f32 %v1725, 1.442695
  %v1727 = vpow.pop %v1726
  %v1728 = vadd.f32 %v1727, 1.0
  %v1729 = vrcp.pop %v1728
  %v1730 = vmul.f32 1.0, %v1729
  %v1731 = vtanh.pop %v1724
  %v1733 = vrot.slane %v1669, 6
  %v1735 = vmul.f32 %v1730, %v1733
  %1737 = vrot.lane.b32.xlu0 %v1731, 32
  %v1738 = vpop.permute.xlu0 %1737
  %v1740 = vmul.f32 %v1730, %v1738
  %1742 = vrot.lane.b32.xlu0 %v1740, 32
  %v1743 = vpop.permute.xlu0 %1742
  %v1745 = vadd.f32 %v1735, %v1743
  %v1746 = vtanh.pop %v1745
  %1748 = vrot.lane.b32.xlu0 %v1746, 32
  %v1749 = vpop.permute.xlu0 %1748
  %v1751 = vmul.f32 %v1730, %v1749
  %v1752 = vpack.c.bf16 %v1751, %v1751
  %1754 = vrot.lane.b32.xlu0 %v1752, 64
  %v1755 = vpop.permute.xlu0 %1754
  %v1757 = vsel %vm140, %v1755, 0
  %1759 = vmatprep.subr.bf16.mxu0 0
  %1760 = vmatpush1.bf16.msra.mxu0 %v1371
  %1761 = vmatprep.subr.bf16.mxu0 0
  %1762 = vmatpush1.bf16.msra.mxu0 %v1372
  %1763 = vmatprep.subr.bf16.mxu0 0
  %1764 = vmatpush1.bf16.msra.mxu0 0
  %1765 = vmatprep.subr.bf16.mxu0 0
  %1766 = vmatpush1.bf16.msra.mxu0 0
  %1767 = vmatprep.subr.bf16.mxu0 0
  %1768 = vmatpush1.bf16.msra.mxu0 0
  %1769 = vmatprep.subr.bf16.mxu0 0
  %1770 = vmatpush1.bf16.msra.mxu0 0
  %1771 = vmatprep.subr.bf16.mxu0 0
  %1772 = vmatpush1.bf16.msra.mxu0 0
  %1773 = vmatprep.subr.bf16.mxu0 0
  %1774 = vmatpush1.bf16.msra.mxu0 0
  %1775 = vmatprep.subr.bf16.mxu0 0
  %1776 = vmatpush1.bf16.msra.mxu0 0
  %1777 = vmatprep.subr.bf16.mxu0 0
  %1778 = vmatpush1.bf16.msra.mxu0 0
  %1779 = vmatprep.subr.bf16.mxu0 0
  %1780 = vmatpush1.bf16.msra.mxu0 0
  %1781 = vmatprep.subr.bf16.mxu0 0
  %1782 = vmatpush1.bf16.msra.mxu0 0
  %1783 = vmatprep.subr.bf16.mxu0 0
  %1784 = vmatpush1.bf16.msra.mxu0 0
  %1785 = vmatprep.subr.bf16.mxu0 0
  %1786 = vmatpush1.bf16.msra.mxu0 0
  %1787 = vmatprep.subr.bf16.mxu0 0
  %1788 = vmatpush1.bf16.msra.mxu0 0
  %1789 = vmatprep.subr.bf16.mxu0 0
  %1790 = vmatpush1.bf16.msra.mxu0 0
  %1791 = vmatprep.mubr.bf16.mxu0 0
  %1792 = vmatmul.mubr.bf16.gmra.mrb[0].mxu0 %v1757
  %v1793 = vpop.f32.mrb[0].mxu0
  %v1794 = vadd.f32 0.0, %v1793
  %v1795 = vpop.f32.mrb[0].mxu0
  %v1796 = vpop.f32.mrb[0].mxu0
  %v1797 = vpop.f32.mrb[0].mxu0
  %1798 = vdwg.mxu0
  %v1800 = vrot.slane %v1794, 6
  %v1802 = vadd.f32 %v1356, %v1800
  %v1803 = vxor.u32 %v1802, 2147483648
  %v1804 = vmul.f32 %v1803, 1.442695
  %v1805 = vpow.pop %v1804
  %v1806 = vadd.f32 %v1805, 1.0
  %v1807 = vrcp.pop %v1806
  %v1808 = vmul.f32 1.0, %v1807
  %v1809 = vtanh.pop %v1802
  %v1811 = vrot.slane %v1745, 6
  %v1813 = vmul.f32 %v1808, %v1811
  %1815 = vrot.lane.b32.xlu0 %v1809, 32
  %v1816 = vpop.permute.xlu0 %1815
  %v1818 = vmul.f32 %v1808, %v1816
  %1820 = vrot.lane.b32.xlu0 %v1818, 32
  %v1821 = vpop.permute.xlu0 %1820
  %v1823 = vadd.f32 %v1813, %v1821
  %v1824 = vtanh.pop %v1823
  %1826 = vrot.lane.b32.xlu0 %v1824, 32
  %v1827 = vpop.permute.xlu0 %1826
  %v1829 = vmul.f32 %v1808, %v1827
  %v1830 = vpack.c.bf16 %v1829, %v1829
  %v1832 = vrot.slane %v1830, 1
  %1833 = vrot.lane.b32.xlu0 %v1832, 64
  %v1834 = vpop.permute.xlu0 %1833
  %v1836 = vsel %vm140, %v1834, 0
  %1838 = vmatprep.subr.bf16.mxu0 0
  %1839 = vmatpush1.bf16.msra.mxu0 %v1371
  %1840 = vmatprep.subr.bf16.mxu0 0
  %1841 = vmatpush1.bf16.msra.mxu0 %v1372
  %1842 = vmatprep.subr.bf16.mxu0 0
  %1843 = vmatpush1.bf16.msra.mxu0 0
  %1844 = vmatprep.subr.bf16.mxu0 0
  %1845 = vmatpush1.bf16.msra.mxu0 0
  %1846 = vmatprep.subr.bf16.mxu0 0
  %1847 = vmatpush1.bf16.msra.mxu0 0
  %1848 = vmatprep.subr.bf16.mxu0 0
  %1849 = vmatpush1.bf16.msra.mxu0 0
  %1850 = vmatprep.subr.bf16.mxu0 0
  %1851 = vmatpush1.bf16.msra.mxu0 0
  %1852 = vmatprep.subr.bf16.mxu0 0
  %1853 = vmatpush1.bf16.msra.mxu0 0
  %1854 = vmatprep.subr.bf16.mxu0 0
  %1855 = vmatpush1.bf16.msra.mxu0 0
  %1856 = vmatprep.subr.bf16.mxu0 0
  %1857 = vmatpush1.bf16.msra.mxu0 0
  %1858 = vmatprep.subr.bf16.mxu0 0
  %1859 = vmatpush1.bf16.msra.mxu0 0
  %1860 = vmatprep.subr.bf16.mxu0 0
  %1861 = vmatpush1.bf16.msra.mxu0 0
  %1862 = vmatprep.subr.bf16.mxu0 0
  %1863 = vmatpush1.bf16.msra.mxu0 0
  %1864 = vmatprep.subr.bf16.mxu0 0
  %1865 = vmatpush1.bf16.msra.mxu0 0
  %1866 = vmatprep.subr.bf16.mxu0 0
  %1867 = vmatpush1.bf16.msra.mxu0 0
  %1868 = vmatprep.subr.bf16.mxu0 0
  %1869 = vmatpush1.bf16.msra.mxu0 0
  %1870 = vmatprep.mubr.bf16.mxu0 0
  %1871 = vmatmul.mubr.bf16.gmra.mrb[0].mxu0 %v1836
  %v1872 = vpop.f32.mrb[0].mxu0
  %v1873 = vadd.f32 0.0, %v1872
  %v1874 = vpop.f32.mrb[0].mxu0
  %v1875 = vpop.f32.mrb[0].mxu0
  %v1876 = vpop.f32.mrb[0].mxu0
  %1877 = vdwg.mxu0
  %v1879 = vrot.slane %v1873, 4
  %v1881 = vadd.f32 %v1356, %v1879
  %v1882 = vxor.u32 %v1881, 2147483648
  %v1883 = vmul.f32 %v1882, 1.442695
  %v1884 = vpow.pop %v1883
  %v1885 = vadd.f32 %v1884, 1.0
  %v1886 = vrcp.pop %v1885
  %v1887 = vmul.f32 1.0, %v1886
  %v1888 = vtanh.pop %v1881
  %v1890 = vrot.slane %v1823, 6
  %v1892 = vmul.f32 %v1887, %v1890
  %1894 = vrot.lane.b32.xlu0 %v1888, 32
  %v1895 = vpop.permute.xlu0 %1894
  %v1897 = vmul.f32 %v1887, %v1895
  %1899 = vrot.lane.b32.xlu0 %v1897, 32
  %v1900 = vpop.permute.xlu0 %1899
  %v1902 = vadd.f32 %v1892, %v1900
  %v1903 = vtanh.pop %v1902
  %1905 = vrot.lane.b32.xlu0 %v1903, 32
  %v1906 = vpop.permute.xlu0 %1905
  %v1908 = vmul.f32 %v1887, %v1906
  %v1909 = vpack.c.bf16 %v1908, %v1908
  %v1911 = vrot.slane %v1909, 2
  %1912 = vrot.lane.b32.xlu0 %v1911, 64
  %v1913 = vpop.permute.xlu0 %1912
  %v1915 = vsel %vm140, %v1913, 0
  %1917 = vmatprep.subr.bf16.mxu0 0
  %1918 = vmatpush1.bf16.msra.mxu0 %v1371
  %1919 = vmatprep.subr.bf16.mxu0 0
  %1920 = vmatpush1.bf16.msra.mxu0 %v1372
  %1921 = vmatprep.subr.bf16.mxu0 0
  %1922 = vmatpush1.bf16.msra.mxu0 0
  %1923 = vmatprep.subr.bf16.mxu0 0
  %1924 = vmatpush1.bf16.msra.mxu0 0
  %1925 = vmatprep.subr.bf16.mxu0 0
  %1926 = vmatpush1.bf16.msra.mxu0 0
  %1927 = vmatprep.subr.bf16.mxu0 0
  %1928 = vmatpush1.bf16.msra.mxu0 0
  %1929 = vmatprep.subr.bf16.mxu0 0
  %1930 = vmatpush1.bf16.msra.mxu0 0
  %1931 = vmatprep.subr.bf16.mxu0 0
  %1932 = vmatpush1.bf16.msra.mxu0 0
  %1933 = vmatprep.subr.bf16.mxu0 0
  %1934 = vmatpush1.bf16.msra.mxu0 0
  %1935 = vmatprep.subr.bf16.mxu0 0
  %1936 = vmatpush1.bf16.msra.mxu0 0
  %1937 = vmatprep.subr.bf16.mxu0 0
  %1938 = vmatpush1.bf16.msra.mxu0 0
  %1939 = vmatprep.subr.bf16.mxu0 0
  %1940 = vmatpush1.bf16.msra.mxu0 0
  %1941 = vmatprep.subr.bf16.mxu0 0
  %1942 = vmatpush1.bf16.msra.mxu0 0
  %1943 = vmatprep.subr.bf16.mxu0 0
  %1944 = vmatpush1.bf16.msra.mxu0 0
  %1945 = vmatprep.subr.bf16.mxu0 0
  %1946 = vmatpush1.bf16.msra.mxu0 0
  %1947 = vmatprep.subr.bf16.mxu0 0
  %1948 = vmatpush1.bf16.msra.mxu0 0
  %1949 = vmatprep.mubr.bf16.mxu0 0
  %1950 = vmatmul.mubr.bf16.gmra.mrb[0].mxu0 %v1915
  %v1951 = vpop.f32.mrb[0].mxu0
  %v1952 = vadd.f32 0.0, %v1951
  %v1953 = vpop.f32.mrb[0].mxu0
  %v1954 = vpop.f32.mrb[0].mxu0
  %v1955 = vpop.f32.mrb[0].mxu0
  %1956 = vdwg.mxu0
  %v1958 = vrot.slane %v1952, 2
  %v1960 = vadd.f32 %v1356, %v1958
  %v1961 = vxor.u32 %v1960, 2147483648
  %v1962 = vmul.f32 %v1961, 1.442695
  %v1963 = vpow.pop %v1962
  %v1964 = vadd.f32 %v1963, 1.0
  %v1965 = vrcp.pop %v1964
  %v1966 = vmul.f32 1.0, %v1965
  %v1967 = vtanh.pop %v1960
  %v1969 = vrot.slane %v1902, 6
  %v1971 = vmul.f32 %v1966, %v1969
  %1973 = vrot.lane.b32.xlu0 %v1967, 32
  %v1974 = vpop.permute.xlu0 %1973
  %v1976 = vmul.f32 %v1966, %v1974
  %1978 = vrot.lane.b32.xlu0 %v1976, 32
  %v1979 = vpop.permute.xlu0 %1978
  %v1981 = vadd.f32 %v1971, %v1979
  %v1982 = vtanh.pop %v1981
  %1984 = vrot.lane.b32.xlu0 %v1982, 32
  %v1985 = vpop.permute.xlu0 %1984
  %v1987 = vmul.f32 %v1966, %v1985
  %s1988 = scalar_lea.vmem %s4, 32
  %v1989 = vld [vmem:[%s1988] sm:$0xf]
  %v1990 = vld [vmem:[%s1988 + $0x4] sm:$0xf]
  %v1991 = vld [vmem:[%s1988 + $0x8] sm:$0xf]
  %v1992 = vld [vmem:[%s1988 + $0xc] sm:$0xf]
  %v1993 = vld [vmem:[%s1988 + $0x10] sm:$0xf]
  %v1994 = vld [vmem:[%s1988 + $0x14] sm:$0xf]
  %v1995 = vld [vmem:[%s1988 + $0x18] sm:$0xf]
  %v1996 = vld [vmem:[%s1988 + $0x1c] sm:$0xf]
  %v1997 = vpack.c.bf16 %v1273, %v1273
  %s1998 = scalar_lea.vmem %s6, 1
  %v1999 = vld [vmem:[%s1998] sm:$0x1]
  %v2001 = vlaneseq
  %v2002 = vshrl.u32 %v2001, 7
  %v2003 = vsub.s32 0, %v2002
  %v2004 = vrot.slane %v1999, %v2003
  %v2007 = vrot.slane %v1997, 3
  %v2016 = vunpack.c.l.b16 %v1989
  %v2017 = vunpack.c.l.b16 %v1990
  %v2018 = vunpack.c.l.b16 %v1991
  %v2019 = vunpack.c.l.b16 %v1992
  %v2020 = vunpack.c.l.b16 %v1993
  %v2021 = vunpack.c.l.b16 %v1994
  %v2022 = vunpack.c.l.b16 %v1995
  %v2023 = vunpack.c.l.b16 %v1996
  %v2024 = vpack.c.b16 %v2017, %v2016
  %v2025 = vpack.c.b16 %v2019, %v2018
  %v2026 = vpack.c.b16 %v2021, %v2020
  %v2027 = vpack.c.b16 %v2023, %v2022
  %v2033 = vsel %vm1314, %v2007, 0
  %2035 = vmatprep.subr.bf16.mxu0 0
  %2036 = vmatpush1.bf16.msra.mxu0 %v2024
  %2037 = vmatprep.subr.bf16.mxu0 0
  %2038 = vmatpush1.bf16.msra.mxu0 %v2025
  %2039 = vmatprep.subr.bf16.mxu0 0
  %2040 = vmatpush1.bf16.msra.mxu0 %v2026
  %2041 = vmatprep.subr.bf16.mxu0 0
  %2042 = vmatpush1.bf16.msra.mxu0 %v2027
  %2043 = vmatprep.subr.bf16.mxu0 0
  %2044 = vmatpush1.bf16.msra.mxu0 0
  %2045 = vmatprep.subr.bf16.mxu0 0
  %2046 = vmatpush1.bf16.msra.mxu0 0
  %2047 = vmatprep.subr.bf16.mxu0 0
  %2048 = vmatpush1.bf16.msra.mxu0 0
  %2049 = vmatprep.subr.bf16.mxu0 0
  %2050 = vmatpush1.bf16.msra.mxu0 0
  %2051 = vmatprep.subr.bf16.mxu0 0
  %2052 = vmatpush1.bf16.msra.mxu0 0
  %2053 = vmatprep.subr.bf16.mxu0 0
  %2054 = vmatpush1.bf16.msra.mxu0 0
  %2055 = vmatprep.subr.bf16.mxu0 0
  %2056 = vmatpush1.bf16.msra.mxu0 0
  %2057 = vmatprep.subr.bf16.mxu0 0
  %2058 = vmatpush1.bf16.msra.mxu0 0
  %2059 = vmatprep.subr.bf16.mxu0 0
  %2060 = vmatpush1.bf16.msra.mxu0 0
  %2061 = vmatprep.subr.bf16.mxu0 0
  %2062 = vmatpush1.bf16.msra.mxu0 0
  %2063 = vmatprep.subr.bf16.mxu0 0
  %2064 = vmatpush1.bf16.msra.mxu0 0
  %2065 = vmatprep.subr.bf16.mxu0 0
  %2066 = vmatpush1.bf16.msra.mxu0 0
  %2067 = vmatprep.mubr.bf16.mxu0 0
  %2068 = vmatmul.mubr.bf16.gmra.mrb[0].mxu0 %v2033
  %v2069 = vpop.f32.mrb[0].mxu0
  %v2070 = vadd.f32 %v2004, %v2069
  %v2071 = vpop.f32.mrb[0].mxu0
  %v2072 = vpop.f32.mrb[0].mxu0
  %v2073 = vpop.f32.mrb[0].mxu0
  %2074 = vdwg.mxu0
  %v2075 = vxor.u32 %v2070, 2147483648
  %v2076 = vmul.f32 %v2075, 1.442695
  %v2077 = vpow.pop %v2076
  %v2078 = vadd.f32 %v2077, 1.0
  %v2079 = vrcp.pop %v2078
  %v2080 = vmul.f32 1.0, %v2079
  %v2081 = vtanh.pop %v2070
  %2083 = vrot.lane.b32.xlu0 %v2081, 32
  %v2084 = vpop.permute.xlu0 %2083
  %v2086 = vmul.f32 %v2080, %v2084
  %v2087 = vtanh.pop %v2086
  %2089 = vrot.lane.b32.xlu0 %v2087, 64
  %v2090 = vpop.permute.xlu0 %2089
  %v2092 = vmul.f32 %v2080, %v2090
  %2094 = vrot.lane.b32.xlu0 %v1987, 64
  %v2095 = vpop.permute.xlu0 %2094
  %v2098 = vrot.slane %v2092, 2
  %2099 = vrot.lane.b32.xlu0 %v2098, 96
  %v2100 = vpop.permute.xlu0 %2099
  %v2102 = vsel %vm140, %v2095, %v2100
  %v2103 = vpack.c.bf16 %v2102, %v2102
  %v2104 = vld [vmem:[%s7] sm:$0xf]
  %v2105 = vld [vmem:[%s7 + $0x4] sm:$0xf]
  %v2106 = vld [vmem:[%s7 + $0x8] sm:$0xf]
  %v2107 = vld [vmem:[%s7 + $0xc] sm:$0xf]
  %v2108 = vld [vmem:[%s7 + $0x10] sm:$0xf]
  %v2109 = vld [vmem:[%s7 + $0x14] sm:$0xf]
  %v2110 = vld [vmem:[%s7 + $0x18] sm:$0xf]
  %v2111 = vld [vmem:[%s7 + $0x1c] sm:$0xf]
  %v2112 = vld [vmem:[%s8] sm:$0x1]
  %v2114 = vlaneseq
  %v2115 = vshrl.u32 %v2114, 7
  %v2116 = vsub.s32 0, %v2115
  %v2117 = vrot.slane %v2112, %v2116
  %v2120 = vrot.slane %v2103, 3
  %v2129 = vunpack.c.l.b16 %v2104
  %v2130 = vunpack.c.l.b16 %v2105
  %v2131 = vunpack.c.l.b16 %v2106
  %v2132 = vunpack.c.l.b16 %v2107
  %v2133 = vunpack.c.l.b16 %v2108
  %v2134 = vunpack.c.l.b16 %v2109
  %v2135 = vunpack.c.l.b16 %v2110
  %v2136 = vunpack.c.l.b16 %v2111
  %v2137 = vpack.c.b16 %v2130, %v2129
  %v2138 = vpack.c.b16 %v2132, %v2131
  %v2139 = vpack.c.b16 %v2134, %v2133
  %v2140 = vpack.c.b16 %v2136, %v2135
  %v2146 = vsel %vm1314, %v2120, 0
  %2148 = vmatprep.subr.bf16.mxu0 0
  %2149 = vmatpush1.bf16.msra.mxu0 %v2137
  %2150 = vmatprep.subr.bf16.mxu0 0
  %2151 = vmatpush1.bf16.msra.mxu0 %v2138
  %2152 = vmatprep.subr.bf16.mxu0 0
  %2153 = vmatpush1.bf16.msra.mxu0 %v2139
  %2154 = vmatprep.subr.bf16.mxu0 0
  %2155 = vmatpush1.bf16.msra.mxu0 %v2140
  %2156 = vmatprep.subr.bf16.mxu0 0
  %2157 = vmatpush1.bf16.msra.mxu0 0
  %2158 = vmatprep.subr.bf16.mxu0 0
  %2159 = vmatpush1.bf16.msra.mxu0 0
  %2160 = vmatprep.subr.bf16.mxu0 0
  %2161 = vmatpush1.bf16.msra.mxu0 0
  %2162 = vmatprep.subr.bf16.mxu0 0
  %2163 = vmatpush1.bf16.msra.mxu0 0
  %2164 = vmatprep.subr.bf16.mxu0 0
  %2165 = vmatpush1.bf16.msra.mxu0 0
  %2166 = vmatprep.subr.bf16.mxu0 0
  %2167 = vmatpush1.bf16.msra.mxu0 0
  %2168 = vmatprep.subr.bf16.mxu0 0
  %2169 = vmatpush1.bf16.msra.mxu0 0
  %2170 = vmatprep.subr.bf16.mxu0 0
  %2171 = vmatpush1.bf16.msra.mxu0 0
  %2172 = vmatprep.subr.bf16.mxu0 0
  %2173 = vmatpush1.bf16.msra.mxu0 0
  %2174 = vmatprep.subr.bf16.mxu0 0
  %2175 = vmatpush1.bf16.msra.mxu0 0
  %2176 = vmatprep.subr.bf16.mxu0 0
  %2177 = vmatpush1.bf16.msra.mxu0 0
  %2178 = vmatprep.subr.bf16.mxu0 0
  %2179 = vmatpush1.bf16.msra.mxu0 0
  %2180 = vmatprep.mubr.bf16.mxu0 0
  %2181 = vmatmul.mubr.bf16.gmra.mrb[0].mxu0 %v2146
  %v2182 = vpop.f32.mrb[0].mxu0
  %v2183 = vadd.f32 %v2117, %v2182
  %v2184 = vpop.f32.mrb[0].mxu0
  %v2185 = vpop.f32.mrb[0].mxu0
  %v2186 = vpop.f32.mrb[0].mxu0
  %2187 = vdwg.mxu0
  %v2188 = vmax.f32 %v2183, 0.0
  %v2189 = vld [vmem:[%s9] sm:$0x1]
  %v2190 = vunpack.c.l.bf16 %v2189
  %v2191 = vlaneseq
  %v2192 = vshrl.u32 %v2191, 7
  %v2193 = vsub.s32 0, %v2192
  %v2194 = vrot.slane %v2190, %v2193
  %v2195 = vmul.f32 %v2188, %v2194
  %v2196 = vsel %vm244, %v2195, 0.0
  %2197 = vadd.xlane.f32.xlu0 %v2196
  %v2198 = vpop.xlane.xlu0 %2197
  %v2199 = vld [vmem:[#allocation2] sm:$0x1]
  %v2201 = vlaneseq
  %v2202 = vshrl.u32 %v2201, 7
  %v2203 = vsub.s32 0, %v2202
  %v2204 = vrot.slane %v2199, %v2203
  %v2206 = vadd.f32 %v2198, %v2204
  %v2207 = vxor.u32 %v2206, 2147483648
  %v2208 = vmul.f32 %v2207, 1.442695
  %v2209 = vpow.pop %v2208
  %v2210 = vadd.f32 %v2209, 1.0
  %v2211 = vrcp.pop %v2210
  %v2212 = vmul.f32 1.0, %v2211
  %vm2213 = vcmask 1024
  %2214 = vst.msk [vmem:[%s11] sm:$0x3] %vm2213, %v2212
  // Predicated region
  $region46: #{sentiment_lstm_forward.1} parent=0 // pred_check
    _
  $region47: #{sentiment_lstm_forward.1} parent=0 // pred_check_branch
    %2216 = sbr.rel (0) target = $region49
  $region48: #{sentiment_lstm_forward.1} parent=0 // pred_region
    _
  $region49: #{sentiment_lstm_forward.1} parent=0 // pred_fallthru
    _
  // Predicated region
  $region50: #{sentiment_lstm_forward.1} parent=0 // pred_check
    _
  $region51: #{sentiment_lstm_forward.1} parent=0 // pred_check_branch
    %2218 = sbr.rel (0) target = $region53
  $region52: #{sentiment_lstm_forward.1} parent=0 // pred_region
    _
  $region53: #{sentiment_lstm_forward.1} parent=0 // pred_fallthru
    _

</llo_original>
